<compile_context>
chip_gen: v5e
topology: v5e:2x2
jax: 0.10.0
libtpu: 0.0.40
codegen_flags: <defaults>
</compile_context>

<pallas_src>
import functools

import jax
import jax.numpy as jnp
import numpy as np
from jax.experimental import pallas as pl
from jax.experimental.pallas import tpu as pltpu


def _round_up(x, m):
    return ((x + m - 1) // m) * m


# ---------------- shared math (kernel body == precision-matched reference) ----------------
def _fused_attention_math(x_f32, wqkv, bqkv, wd, bd, *, n_heads, d_k):
    """Attention-across-heads on a channel-major slab.

    x_f32: (C, N) f32, positions on the 128-lane axis.
    wqkv:  (3*H*dk, C) MXU dtype (bf16), rows ordered [q|k|v][head][d], sqrt(d_k) folded into q.
    bqkv:  (3*H*dk, 1) f32.      wd: (C, H*dk) MXU dtype (bf16).      bd: (C, 1) f32.
    Returns (C, N) f32 including the residual add.
    """
    hd = n_heads * d_k
    n_cols = x_f32.shape[1]

    # (1) Fused q/k/v projection: ONE bf16 MXU matmul (f32 accumulation) + one bias add.
    qkv = jnp.dot(wqkv, x_f32.astype(wqkv.dtype),
                  preferred_element_type=jnp.float32) + bqkv            # (3*hd, N) f32

    # Query heads stacked for grouped segment reduces: (H, d_k, N).
    q3 = qkv[:hd].reshape(n_heads, d_k, n_cols)

    res3 = None
    for g in range(n_heads):
        k_g = qkv[hd + g * d_k: hd + (g + 1) * d_k]                     # (d_k, N)
        v_g = qkv[2 * hd + g * d_k: 2 * hd + (g + 1) * d_k]             # (d_k, N)

        # (2) Packed scores vs key-head g: s_g[h, s] = sum_d q[h,d,s]*k_g[d,s]  -> (H, N).
        #     (sqrt(d_k) scale is already folded into the q rows.)
        s_g = jnp.sum(q3 * k_g[None], axis=1)

        # (3) Softmax over the QUERY-head (sublane) axis — PyTorch softmax(dim=2).
        #     Exact reciprocal (fixes the approx-recip tolerance failure of the previous run).
        m = jnp.max(s_g, axis=0, keepdims=True)                          # (1, N)
        e = jnp.exp(s_g - m)                                             # (H, N)
        den = jnp.sum(e, axis=0, keepdims=True)                          # (1, N)
        attn_g = e * (1.0 / den)                                         # (H, N)

        # (4) res[h, d, s] += attn_g[h, s] * v_g[d, s]   (accumulate over key heads g).
        term = attn_g[:, None, :] * v_g[None]                            # (H, d_k, N)
        res3 = term if res3 is None else res3 + term

    # (5) Fused output projection (bf16 MXU, f32 acc) + bias + residual.
    res = res3.reshape(hd, n_cols).astype(wd.dtype)                      # bf16 feed, no scratch
    return jnp.dot(wd, res, preferred_element_type=jnp.float32) + bd + x_f32


# ---------------- Pallas kernel ----------------
def _attn_kernel(x_ref, wqkv_ref, bqkv_ref, wd_ref, bd_ref, o_ref, *, n_heads, d_k):
    # x_ref / o_ref: (C, TN) lane-dense tiles (batch dim squeezed by the BlockSpec).
    out = _fused_attention_math(
        x_ref[...].astype(jnp.float32),
        wqkv_ref[...], bqkv_ref[...], wd_ref[...], bd_ref[...],
        n_heads=n_heads, d_k=d_k)
    o_ref[...] = out.astype(o_ref.dtype)


# ---------------- parameter prep (one-time, outside the kernel) ----------------
def _prep_params(params, *, n_heads, d_k, mxu_dtype=jnp.bfloat16):
    """Fuse / reorder the Linear weights for the kernel.

    Rows are reordered from PyTorch's [head][component][d] to [component][head][d] so q/k/v are
    contiguous row blocks of one projection; sqrt(d_k) (the module divides by d_k**-0.5) is
    folded into the q rows; matmul weights are cast to the MXU dtype (bf16 by default — pass
    mxu_dtype=jnp.float32 for exact-f32 numerics)."""
    W_qkv, b_qkv, W_dense, b_dense = params
    C = W_dense.shape[0]
    hd = n_heads * d_k

    wqkv = jnp.transpose(W_qkv.reshape(n_heads, 3, d_k, C), (1, 0, 2, 3)).reshape(3 * hd, C)
    bqkv = jnp.transpose(b_qkv.reshape(n_heads, 3, d_k), (1, 0, 2)).reshape(3 * hd, 1)

    sqrt_dk = jnp.float32(float(d_k) ** 0.5)
    row_scale = jnp.concatenate([jnp.full((hd, 1), sqrt_dk, jnp.float32),
                                 jnp.ones((2 * hd, 1), jnp.float32)], axis=0)
    wqkv = (wqkv.astype(jnp.float32) * row_scale).astype(mxu_dtype)
    bqkv = bqkv.astype(jnp.float32) * row_scale                      # biases stay f32
    wd = W_dense.astype(mxu_dtype)
    bd = b_dense.reshape(C, 1).astype(jnp.float32)
    return wqkv, bqkv, wd, bd


# ---------------- pallas_call wrapper ----------------
def _attention_pallas(x3, wqkv, bqkv, wd, bd, *, n_heads, d_k, block_cols, vmem_limit_bytes):
    B, C, S = x3.shape
    hd = n_heads * d_k
    hd3 = 3 * hd

    # Lane-axis tile width: multiple of 128, capped at block_cols. Padded position columns stay
    # finite through the softmax and are sliced off below.
    # TODO(synk): at real UNet resolutions raise block_cols (1024-2048), pass vmem_limit_bytes,
    # and keep an even total block count so v7x's two TensorCores stay balanced.
    tn = min(_round_up(S, 128), _round_up(block_cols, 128))
    s_pad = _round_up(S, tn)
    if s_pad != S:
        x3 = jnp.pad(x3, ((0, 0), (0, 0), (0, s_pad - S)))

    cparams = dict(dimension_semantics=("parallel", "parallel"))
    if vmem_limit_bytes is not None:
        cparams["vmem_limit_bytes"] = int(vmem_limit_bytes)

    kernel = functools.partial(_attn_kernel, n_heads=n_heads, d_k=d_k)
    out = pl.pallas_call(
        kernel,
        out_shape=jax.ShapeDtypeStruct((B, C, s_pad), x3.dtype),
        grid_spec=pltpu.PrefetchScalarGridSpec(
            num_scalar_prefetch=0,
            grid=(B, s_pad // tn),
            in_specs=[
                # x tile: squeezed batch dim, channels on sublanes, positions on the lane axis.
                pl.BlockSpec((None, C, tn), lambda b, j: (b, 0, j)),
                pl.BlockSpec((hd3, C), lambda b, j: (0, 0)),   # fused W_qkv (bf16, resident)
                pl.BlockSpec((hd3, 1), lambda b, j: (0, 0)),   # fused b_qkv (f32, sqrt(d_k) folded)
                pl.BlockSpec((C, hd), lambda b, j: (0, 0)),    # W_dense (bf16, resident)
                pl.BlockSpec((C, 1), lambda b, j: (0, 0)),     # b_dense (f32)
            ],
            out_specs=pl.BlockSpec((None, C, tn), lambda b, j: (b, 0, j)),
        ),
        compiler_params=pltpu.CompilerParams(**cparams),
    )(x3, wqkv, bqkv, wd, bd)
    return out[:, :, :S] if s_pad != S else out


def attention_block_forward(x, params, *, n_heads, d_k, block_cols=1024,
                            mxu_dtype=jnp.bfloat16, vmem_limit_bytes=None):
    """x: (B, C, H, W) NCHW -> (B, C, H, W).  The PyTorch forward's `t` argument is unused."""
    B, C, Hh, Ww = x.shape
    prepped = _prep_params(params, n_heads=n_heads, d_k=d_k, mxu_dtype=mxu_dtype)
    x3 = x.reshape(B, C, Hh * Ww)                     # free view — no HBM transpose
    out3 = _attention_pallas(x3, *prepped, n_heads=n_heads, d_k=d_k,
                             block_cols=block_cols, vmem_limit_bytes=vmem_limit_bytes)
    return out3.reshape(B, C, Hh, Ww)


# ---------------- references ----------------
def attention_block_reference(x, params, *, n_heads, d_k):
    """Pure-JAX f32 reference mirroring the PyTorch forward exactly."""
    W_qkv, b_qkv, W_dense, b_dense = params
    B, C, Hh, Ww = x.shape
    xs = jnp.transpose(x.reshape(B, C, -1), (0, 2, 1))                 # (B, S, C)
    qkv = xs @ W_qkv.T + b_qkv
    qkv = qkv.reshape(B, -1, n_heads, d_k * 3)
    q, k, v = qkv[..., :d_k], qkv[..., d_k:2 * d_k], qkv[..., 2 * d_k:]
    scores = jnp.einsum('bshd,bsgd->bshg', q, k) / (d_k ** -0.5)       # DIVIDE by scale (as in torch)
    attn = jax.nn.softmax(scores, axis=2)                              # softmax over query-head axis
    res = jnp.einsum('bshg,bsgd->bshd', attn, v)
    res = res.reshape(B, -1, n_heads * d_k)
    res = res @ W_dense.T + b_dense + xs
    return jnp.transpose(res, (0, 2, 1)).reshape(B, C, Hh, Ww)


def attention_block_matched_reference(x, prepped, *, n_heads, d_k):
    """Pure-JAX replica of the kernel's exact mixed-precision math (same bf16 operands, f32
    accumulation, same op order) — used for the tight algorithmic check of the Pallas plumbing."""
    wqkv, bqkv, wd, bd = prepped
    B, C, Hh, Ww = x.shape
    S = Hh * Ww
    x_cm = jnp.transpose(x.reshape(B, C, S), (1, 0, 2)).reshape(C, B * S).astype(jnp.float32)
    out = _fused_attention_math(x_cm, wqkv, bqkv, wd, bd, n_heads=n_heads, d_k=d_k)
    return jnp.transpose(out.reshape(C, B, S), (1, 0, 2)).reshape(B, C, Hh, Ww).astype(x.dtype)


if __name__ == "__main__":
    # Module-consistent small shapes: n_ch=32 (divisible by n_groups=16), d_k defaults to n_ch.
    B, N_CH, HEIGHT, WIDTH = 2, 32, 16, 16
    N_HEADS, D_K = 4, 32     # d_k = n_ch (PyTorch default when d_k is None)
    # NOTE: GroupNorm(n_groups=16, n_ch) exists in __init__ but is never applied in forward.

    key = jax.random.PRNGKey(0)
    k1, k2, k3, k4, kx = jax.random.split(key, 5)
    fan1 = float(N_CH)
    fan2 = float(N_HEADS * D_K)
    W_qkv = jax.random.uniform(k1, (N_HEADS * D_K * 3, N_CH), jnp.float32, -1.0, 1.0) / (fan1 ** 0.5)
    b_qkv = jax.random.uniform(k2, (N_HEADS * D_K * 3,), jnp.float32, -1.0, 1.0) / (fan1 ** 0.5)
    W_dense = jax.random.uniform(k3, (N_CH, N_HEADS * D_K), jnp.float32, -1.0, 1.0) / (fan2 ** 0.5)
    b_dense = jax.random.uniform(k4, (N_CH,), jnp.float32, -1.0, 1.0) / (fan2 ** 0.5)
    params = (W_qkv, b_qkv, W_dense, b_dense)

    x = jax.random.normal(kx, (B, N_CH, HEIGHT, WIDTH), jnp.float32)

    # S = 256 positions per batch -> tn = 256, grid = (B, 1) = 2 independent (even) tiles.
    fwd = jax.jit(functools.partial(attention_block_forward, n_heads=N_HEADS, d_k=D_K))
    out = jax.block_until_ready(fwd(x, params))
    assert out.shape == (B, N_CH, HEIGHT, WIDTH)

    # (a) Tight check vs. a precision-matched reference (same bf16 MXU operands / f32 accumulation
    #     / exact softmax reciprocal): verifies the Pallas tiling, layouts, weight fusion and
    #     residual exactly; differences are only f32 accumulation-order noise.
    prepped = _prep_params(params, n_heads=N_HEADS, d_k=D_K)
    ref_matched = attention_block_matched_reference(x, prepped, n_heads=N_HEADS, d_k=D_K)
    np.testing.assert_allclose(np.asarray(out), np.asarray(ref_matched), rtol=2e-3, atol=2e-3)

    # (b) Sanity band vs. the faithful full-f32 reference.  The kernel intentionally uses bf16
    #     MXU operands (perf review item 1); because the module multiplies logits by sqrt(d_k),
    #     bf16 input rounding shows up as a few-percent band after the softmax exp, hence the
    #     loose tolerance here.  (For exact-f32 numerics pass mxu_dtype=jnp.float32.)
    ref_f32 = attention_block_reference(x, params, n_heads=N_HEADS, d_k=D_K)
    np.testing.assert_allclose(np.asarray(out), np.asarray(ref_f32), rtol=1e-1, atol=1e-1)

    print("KERNEL_OK")
</pallas_src>

<mosaic_0001>
module attributes {stable_mosaic.version = 11 : i64} {
  func.func @_attn_kernel(%arg0: i32, %arg1: i32, %arg2: memref<1x32x256xf32, #tpu.memory_space<vmem>>, %arg3: memref<384x32xbf16, #tpu.memory_space<vmem>>, %arg4: memref<384x1xf32, #tpu.memory_space<vmem>>, %arg5: memref<32x128xbf16, #tpu.memory_space<vmem>>, %arg6: memref<32x1xf32, #tpu.memory_space<vmem>>, %arg7: memref<1x32x256xf32, #tpu.memory_space<vmem>>) attributes {dimension_semantics = [#tpu.dimension_semantics<parallel>, #tpu.dimension_semantics<parallel>], iteration_bounds = array<i64: 2, 1>, scalar_prefetch = 0 : i64, scratch_operands = 0 : i64, tpu.core_type = #tpu.core_type<tc>, window_params = [{transform_indices = @transform_0, window_bounds = array<i64: 1, 32, 256>}, {pipeline_mode = #tpu.pipeline_mode<synchronous>, transform_indices = @transform_1, window_bounds = array<i64: 384, 32>}, {pipeline_mode = #tpu.pipeline_mode<synchronous>, transform_indices = @transform_2, window_bounds = array<i64: 384, 1>}, {pipeline_mode = #tpu.pipeline_mode<synchronous>, transform_indices = @transform_3, window_bounds = array<i64: 32, 128>}, {pipeline_mode = #tpu.pipeline_mode<synchronous>, transform_indices = @transform_4, window_bounds = array<i64: 32, 1>}, {transform_indices = @transform_5, window_bounds = array<i64: 1, 32, 256>}]} {
    %c0 = arith.constant 0 : index
    %c0_0 = arith.constant 0 : index
    %c0_1 = arith.constant 0 : index
    %0 = vector.load %arg2[%c0, %c0_0, %c0_1] : memref<1x32x256xf32, #tpu.memory_space<vmem>>, vector<1x32x256xf32>
    %1 = vector.shape_cast %0 : vector<1x32x256xf32> to vector<32x256xf32>
    %c0_2 = arith.constant 0 : index
    %c0_3 = arith.constant 0 : index
    %2 = vector.load %arg3[%c0_2, %c0_3] : memref<384x32xbf16, #tpu.memory_space<vmem>>, vector<384x32xbf16>
    %c0_4 = arith.constant 0 : index
    %c0_5 = arith.constant 0 : index
    %3 = vector.load %arg4[%c0_4, %c0_5] : memref<384x1xf32, #tpu.memory_space<vmem>>, vector<384x1xf32>
    %c0_6 = arith.constant 0 : index
    %c0_7 = arith.constant 0 : index
    %4 = vector.load %arg5[%c0_6, %c0_7] : memref<32x128xbf16, #tpu.memory_space<vmem>>, vector<32x128xbf16>
    %c0_8 = arith.constant 0 : index
    %c0_9 = arith.constant 0 : index
    %5 = vector.load %arg6[%c0_8, %c0_9] : memref<32x1xf32, #tpu.memory_space<vmem>>, vector<32x1xf32>
    %6 = arith.truncf %1 : vector<32x256xf32> to vector<32x256xbf16>
    %cst = arith.constant dense<0.000000e+00> : vector<384x256xf32>
    %7 = tpu.matmul %2, %6, %cst {dimension_numbers = #tpu.dot_dimension_numbers<[1], [0], [0], [1], [0, 0, 1, 1], [], []>} : vector<384x32xbf16>, vector<32x256xbf16>, vector<384x256xf32> -> vector<384x256xf32>
    %8 = vector.broadcast %3 : vector<384x1xf32> to vector<384x256xf32>
    %9 = arith.addf %7, %8 : vector<384x256xf32>
    %10 = vector.extract_strided_slice %9 {offsets = [0, 0], sizes = [128, 256], strides = [1, 1]} : vector<384x256xf32> to vector<128x256xf32>
    %11 = vector.shape_cast %10 : vector<128x256xf32> to vector<4x32x256xf32>
    %12 = vector.extract_strided_slice %9 {offsets = [128, 0], sizes = [32, 256], strides = [1, 1]} : vector<384x256xf32> to vector<32x256xf32>
    %13 = vector.extract_strided_slice %9 {offsets = [256, 0], sizes = [32, 256], strides = [1, 1]} : vector<384x256xf32> to vector<32x256xf32>
    %14 = vector.shape_cast %12 : vector<32x256xf32> to vector<1x32x256xf32>
    %15 = vector.broadcast %14 : vector<1x32x256xf32> to vector<4x32x256xf32>
    %16 = arith.mulf %11, %15 : vector<4x32x256xf32>
    %cst_10 = arith.constant dense<0.000000e+00> : vector<4x256xf32>
    %17 = vector.multi_reduction <add>, %16, %cst_10 [1] : vector<4x32x256xf32> to vector<4x256xf32>
    %cst_11 = arith.constant dense<0xFF800000> : vector<256xf32>
    %18 = vector.multi_reduction <maximumf>, %17, %cst_11 [0] : vector<4x256xf32> to vector<256xf32>
    %19 = vector.shape_cast %18 : vector<256xf32> to vector<1x256xf32>
    %20 = vector.broadcast %19 : vector<1x256xf32> to vector<4x256xf32>
    %21 = arith.subf %17, %20 : vector<4x256xf32>
    %22 = math.exp %21 : vector<4x256xf32>
    %cst_12 = arith.constant dense<0.000000e+00> : vector<256xf32>
    %23 = vector.multi_reduction <add>, %22, %cst_12 [0] : vector<4x256xf32> to vector<256xf32>
    %24 = vector.shape_cast %23 : vector<256xf32> to vector<1x256xf32>
    %cst_13 = arith.constant 1.000000e+00 : f32
    %25 = vector.broadcast %cst_13 : f32 to vector<1x256xf32>
    %26 = arith.divf %25, %24 : vector<1x256xf32>
    %27 = vector.broadcast %26 : vector<1x256xf32> to vector<4x256xf32>
    %28 = arith.mulf %22, %27 : vector<4x256xf32>
    %29 = vector.shape_cast %28 : vector<4x256xf32> to vector<4x1x256xf32>
    %30 = vector.shape_cast %13 : vector<32x256xf32> to vector<1x32x256xf32>
    %31 = vector.broadcast %29 : vector<4x1x256xf32> to vector<4x32x256xf32>
    %32 = vector.broadcast %30 : vector<1x32x256xf32> to vector<4x32x256xf32>
    %33 = arith.mulf %31, %32 : vector<4x32x256xf32>
    %34 = vector.extract_strided_slice %9 {offsets = [160, 0], sizes = [32, 256], strides = [1, 1]} : vector<384x256xf32> to vector<32x256xf32>
    %35 = vector.extract_strided_slice %9 {offsets = [288, 0], sizes = [32, 256], strides = [1, 1]} : vector<384x256xf32> to vector<32x256xf32>
    %36 = vector.shape_cast %34 : vector<32x256xf32> to vector<1x32x256xf32>
    %37 = vector.broadcast %36 : vector<1x32x256xf32> to vector<4x32x256xf32>
    %38 = arith.mulf %11, %37 : vector<4x32x256xf32>
    %cst_14 = arith.constant dense<0.000000e+00> : vector<4x256xf32>
    %39 = vector.multi_reduction <add>, %38, %cst_14 [1] : vector<4x32x256xf32> to vector<4x256xf32>
    %cst_15 = arith.constant dense<0xFF800000> : vector<256xf32>
    %40 = vector.multi_reduction <maximumf>, %39, %cst_15 [0] : vector<4x256xf32> to vector<256xf32>
    %41 = vector.shape_cast %40 : vector<256xf32> to vector<1x256xf32>
    %42 = vector.broadcast %41 : vector<1x256xf32> to vector<4x256xf32>
    %43 = arith.subf %39, %42 : vector<4x256xf32>
    %44 = math.exp %43 : vector<4x256xf32>
    %cst_16 = arith.constant dense<0.000000e+00> : vector<256xf32>
    %45 = vector.multi_reduction <add>, %44, %cst_16 [0] : vector<4x256xf32> to vector<256xf32>
    %46 = vector.shape_cast %45 : vector<256xf32> to vector<1x256xf32>
    %cst_17 = arith.constant 1.000000e+00 : f32
    %47 = vector.broadcast %cst_17 : f32 to vector<1x256xf32>
    %48 = arith.divf %47, %46 : vector<1x256xf32>
    %49 = vector.broadcast %48 : vector<1x256xf32> to vector<4x256xf32>
    %50 = arith.mulf %44, %49 : vector<4x256xf32>
    %51 = vector.shape_cast %50 : vector<4x256xf32> to vector<4x1x256xf32>
    %52 = vector.shape_cast %35 : vector<32x256xf32> to vector<1x32x256xf32>
    %53 = vector.broadcast %51 : vector<4x1x256xf32> to vector<4x32x256xf32>
    %54 = vector.broadcast %52 : vector<1x32x256xf32> to vector<4x32x256xf32>
    %55 = arith.mulf %53, %54 : vector<4x32x256xf32>
    %56 = arith.addf %33, %55 : vector<4x32x256xf32>
    %57 = vector.extract_strided_slice %9 {offsets = [192, 0], sizes = [32, 256], strides = [1, 1]} : vector<384x256xf32> to vector<32x256xf32>
    %58 = vector.extract_strided_slice %9 {offsets = [320, 0], sizes = [32, 256], strides = [1, 1]} : vector<384x256xf32> to vector<32x256xf32>
    %59 = vector.shape_cast %57 : vector<32x256xf32> to vector<1x32x256xf32>
    %60 = vector.broadcast %59 : vector<1x32x256xf32> to vector<4x32x256xf32>
    %61 = arith.mulf %11, %60 : vector<4x32x256xf32>
    %cst_18 = arith.constant dense<0.000000e+00> : vector<4x256xf32>
    %62 = vector.multi_reduction <add>, %61, %cst_18 [1] : vector<4x32x256xf32> to vector<4x256xf32>
    %cst_19 = arith.constant dense<0xFF800000> : vector<256xf32>
    %63 = vector.multi_reduction <maximumf>, %62, %cst_19 [0] : vector<4x256xf32> to vector<256xf32>
    %64 = vector.shape_cast %63 : vector<256xf32> to vector<1x256xf32>
    %65 = vector.broadcast %64 : vector<1x256xf32> to vector<4x256xf32>
    %66 = arith.subf %62, %65 : vector<4x256xf32>
    %67 = math.exp %66 : vector<4x256xf32>
    %cst_20 = arith.constant dense<0.000000e+00> : vector<256xf32>
    %68 = vector.multi_reduction <add>, %67, %cst_20 [0] : vector<4x256xf32> to vector<256xf32>
    %69 = vector.shape_cast %68 : vector<256xf32> to vector<1x256xf32>
    %cst_21 = arith.constant 1.000000e+00 : f32
    %70 = vector.broadcast %cst_21 : f32 to vector<1x256xf32>
    %71 = arith.divf %70, %69 : vector<1x256xf32>
    %72 = vector.broadcast %71 : vector<1x256xf32> to vector<4x256xf32>
    %73 = arith.mulf %67, %72 : vector<4x256xf32>
    %74 = vector.shape_cast %73 : vector<4x256xf32> to vector<4x1x256xf32>
    %75 = vector.shape_cast %58 : vector<32x256xf32> to vector<1x32x256xf32>
    %76 = vector.broadcast %74 : vector<4x1x256xf32> to vector<4x32x256xf32>
    %77 = vector.broadcast %75 : vector<1x32x256xf32> to vector<4x32x256xf32>
    %78 = arith.mulf %76, %77 : vector<4x32x256xf32>
    %79 = arith.addf %56, %78 : vector<4x32x256xf32>
    %80 = vector.extract_strided_slice %9 {offsets = [224, 0], sizes = [32, 256], strides = [1, 1]} : vector<384x256xf32> to vector<32x256xf32>
    %81 = vector.extract_strided_slice %9 {offsets = [352, 0], sizes = [32, 256], strides = [1, 1]} : vector<384x256xf32> to vector<32x256xf32>
    %82 = vector.shape_cast %80 : vector<32x256xf32> to vector<1x32x256xf32>
    %83 = vector.broadcast %82 : vector<1x32x256xf32> to vector<4x32x256xf32>
    %84 = arith.mulf %11, %83 : vector<4x32x256xf32>
    %cst_22 = arith.constant dense<0.000000e+00> : vector<4x256xf32>
    %85 = vector.multi_reduction <add>, %84, %cst_22 [1] : vector<4x32x256xf32> to vector<4x256xf32>
    %cst_23 = arith.constant dense<0xFF800000> : vector<256xf32>
    %86 = vector.multi_reduction <maximumf>, %85, %cst_23 [0] : vector<4x256xf32> to vector<256xf32>
    %87 = vector.shape_cast %86 : vector<256xf32> to vector<1x256xf32>
    %88 = vector.broadcast %87 : vector<1x256xf32> to vector<4x256xf32>
    %89 = arith.subf %85, %88 : vector<4x256xf32>
    %90 = math.exp %89 : vector<4x256xf32>
    %cst_24 = arith.constant dense<0.000000e+00> : vector<256xf32>
    %91 = vector.multi_reduction <add>, %90, %cst_24 [0] : vector<4x256xf32> to vector<256xf32>
    %92 = vector.shape_cast %91 : vector<256xf32> to vector<1x256xf32>
    %cst_25 = arith.constant 1.000000e+00 : f32
    %93 = vector.broadcast %cst_25 : f32 to vector<1x256xf32>
    %94 = arith.divf %93, %92 : vector<1x256xf32>
    %95 = vector.broadcast %94 : vector<1x256xf32> to vector<4x256xf32>
    %96 = arith.mulf %90, %95 : vector<4x256xf32>
    %97 = vector.shape_cast %96 : vector<4x256xf32> to vector<4x1x256xf32>
    %98 = vector.shape_cast %81 : vector<32x256xf32> to vector<1x32x256xf32>
    %99 = vector.broadcast %97 : vector<4x1x256xf32> to vector<4x32x256xf32>
    %100 = vector.broadcast %98 : vector<1x32x256xf32> to vector<4x32x256xf32>
    %101 = arith.mulf %99, %100 : vector<4x32x256xf32>
    %102 = arith.addf %79, %101 : vector<4x32x256xf32>
    %103 = vector.shape_cast %102 : vector<4x32x256xf32> to vector<128x256xf32>
    %104 = arith.truncf %103 : vector<128x256xf32> to vector<128x256xbf16>
    %cst_26 = arith.constant dense<0.000000e+00> : vector<32x256xf32>
    %105 = tpu.matmul %4, %104, %cst_26 {dimension_numbers = #tpu.dot_dimension_numbers<[1], [0], [0], [1], [0, 0, 1, 1], [], []>} : vector<32x128xbf16>, vector<128x256xbf16>, vector<32x256xf32> -> vector<32x256xf32>
    %106 = vector.broadcast %5 : vector<32x1xf32> to vector<32x256xf32>
    %107 = arith.addf %105, %106 : vector<32x256xf32>
    %108 = arith.addf %107, %1 : vector<32x256xf32>
    %c0_27 = arith.constant 0 : index
    %c0_28 = arith.constant 0 : index
    %c0_29 = arith.constant 0 : index
    %109 = vector.load %arg7[%c0_27, %c0_28, %c0_29] : memref<1x32x256xf32, #tpu.memory_space<vmem>>, vector<1x32x256xf32>
    %110 = vector.shape_cast %109 : vector<1x32x256xf32> to vector<32x256xf32>
    %111 = vector.shape_cast %108 : vector<32x256xf32> to vector<1x32x256xf32>
    tpu.vector_store %arg7[%c0_27, %c0_28, %c0_29], %111 {strides = array<i32>} : memref<1x32x256xf32, #tpu.memory_space<vmem>>, vector<1x32x256xf32>,
    return
  }
  func.func @transform_0(%arg0: i32, %arg1: i32) -> (i32, i32, i32) {
    %c0_i32 = arith.constant 0 : i32
    %c0_i32_0 = arith.constant 0 : i32
    return %arg0, %c0_i32, %arg1 : i32, i32, i32
  }
  func.func @transform_1(%arg0: i32, %arg1: i32) -> (i32, i32) {
    %c0_i32 = arith.constant 0 : i32
    %c0_i32_0 = arith.constant 0 : i32
    %c0_i32_1 = arith.constant 0 : i32
    return %c0_i32, %c0_i32_0 : i32, i32
  }
  func.func @transform_2(%arg0: i32, %arg1: i32) -> (i32, i32) {
    %c0_i32 = arith.constant 0 : i32
    %c0_i32_0 = arith.constant 0 : i32
    %c0_i32_1 = arith.constant 0 : i32
    return %c0_i32, %c0_i32_0 : i32, i32
  }
  func.func @transform_3(%arg0: i32, %arg1: i32) -> (i32, i32) {
    %c0_i32 = arith.constant 0 : i32
    %c0_i32_0 = arith.constant 0 : i32
    %c0_i32_1 = arith.constant 0 : i32
    return %c0_i32, %c0_i32_0 : i32, i32
  }
  func.func @transform_4(%arg0: i32, %arg1: i32) -> (i32, i32) {
    %c0_i32 = arith.constant 0 : i32
    %c0_i32_0 = arith.constant 0 : i32
    %c0_i32_1 = arith.constant 0 : i32
    return %c0_i32, %c0_i32_0 : i32, i32
  }
  func.func @transform_5(%arg0: i32, %arg1: i32) -> (i32, i32, i32) {
    %c0_i32 = arith.constant 0 : i32
    %c0_i32_0 = arith.constant 0 : i32
    return %arg0, %c0_i32, %arg1 : i32, i32, i32
  }
}

</mosaic_0001>

<llo_original>
// kernel: mul.2
$region0: #{mul.2}
  #allocation0 [shape = 's32[1]{0}', space=sflag, size = 0x4, scoped, tag = 'scoped memory for mul.2']
  %s0 = inlined_call_operand.vmem [shape: f32[384], index: 0, kind: input, shape index: {}]
  %s1 = inlined_call_operand.vmem [shape: f32[384], index: 1, kind: input, shape index: {}]
  %s2 = inlined_call_operand.vmem [shape: f32[384], index: 2, kind: output, shape index: {}]
  %v3 = vld [vmem:[%s0] sm:$0x7]
  %v4 = vld [vmem:[%s1] sm:$0x7]
  %5 = xla_tuple %v3, %v4
  %6 = xla_tuple %5
  %v7 = vmul.f32 %v3, %v4
  %8 = xla_tuple %v7
  %9 = vst [vmem:[%s2] sm:$0xf] %v7

// kernel: attention_block_forward.1
$region0: #{attention_block_forward.1}
  #allocation0 [shape = 'u32[]', space=smem, size = 0x4, offset = 0x4, fixed_abs, tag = 'smem constant byte address 0x4 - core index']
  #allocation1 [shape = 'u32[72,128]{1,0:T(1,128)}', space=vmem, size = 0x9000, scoped, tag = 'internal scratch']
  %s0 = inlined_call_operand.vmem [shape: f32[2,32,256], index: 0, kind: input, shape index: {}]
  %s1 = inlined_call_operand.vmem [shape: bf16[384,32], index: 1, kind: input, shape index: {}]
  %s2 = inlined_call_operand.vmem [shape: f32[384,1], index: 2, kind: input, shape index: {}]
  %s3 = inlined_call_operand.vmem [shape: bf16[32,128], index: 3, kind: input, shape index: {}]
  %s4 = inlined_call_operand.vmem [shape: f32[32,1], index: 4, kind: input, shape index: {}]
  %s5 = inlined_call_operand.vmem [shape: f32[2,32,256], index: 5, kind: output, shape index: {}]
  %s6 = sld [smem:[#allocation0]]
  $region53: #{attention_block_forward.1} parent=0
    _
  %s8 = ssub.s32 1, %s6
  %s9 = scalar_select 0, %s8, %s6
  loop: start=0, step=1, limit=4
  $region2: #{attention_block_forward.1} parent=0 // loop_pre_header
    _
  $region3: #{attention_block_forward.1} parent=0 // loop_header
    %s11 = sphi 0, %s15
    %p12 = scmp.ge.s32.totalorder %s11, 4
    %s18 = sphi 0, %s30
    %s19 = sphi 0, %s26
    %s20 = sphi 0, %s18
    %s21 = sphi 0, %s19
    %s22 = sphi 0, %s20
    %s23 = sphi 0, %s21
    %s35 = sphi 0, %s37
    %s38 = sphi 0, %s35
    %s39 = sphi 0, %s38
    %s55 = sphi 0, %s39
    %s59 = sphi 0, %s59
    %s61 = sphi 0, %s59
    %s62 = sphi 0, %s61
    %s76 = sphi 0, %s62
    %s80 = sphi 0, %s80
    %s82 = sphi 0, %s80
    %s83 = sphi 0, %s82
    %s97 = sphi 0, %s83
    %s101 = sphi 0, %s101
    %s103 = sphi 0, %s101
    %s104 = sphi 0, %s103
    %s118 = sphi 0, %s104
    %s122 = sphi 0, %s122
    %s124 = sphi 0, %s122
    %s125 = sphi 0, %s124
    %s139 = sphi 0, %s125
    %s147 = sphi 0, %s149
    %s150 = sphi 0, %s147
    %s151 = sphi 0, %s150
    %s167 = sphi 0, %s151
  $region4: #{attention_block_forward.1} parent=0 // loop_header_branch
    %14 = sbr.rel (%p12) target = $region8
  $region5: #{attention_block_forward.1} parent=0 // loop_body
    %s16 = ssub.s32 %s11, 1
    %s17 = ssub.s32 %s11, 2
    %s24 = sadd.s32 1, %s19
    %p25 = scmp.ge.s32.totalorder %s24, 1
    %s26 = scalar_select %p25, 0, %s24
    %s27 = sadd.s32 1, %s18
    %s28 = scalar_select %p25, %s27, %s18
    %p29 = scmp.ge.s32.totalorder %s28, 2
    %s30 = scalar_select %p29, 0, %s28
    %s31 = ssub.s32 %s18, %s30
    %s32 = ssub.s32 %s19, %s26
    %s33 = sor.u32 %s31, %s32
    %p34 = scmp.eq.s32.totalorder %s33, 0
    %s36 = sadd.s32 %s35, 1
    %s37 = scalar_select %p34, %s35, %s36
    %p40 = pneg %p34
    %p41 = scmp.eq.s32.totalorder %s11, 1
    %p42 = por %p40, %p41
    %p43 = scmp.ne.s32.totalorder %s35, %s38
    %p44 = scmp.eq.s32.totalorder %s11, 0
    %p45 = por %p43, %p44
    %p46 = scmp.ne.s32.totalorder %s35, %s38
    %p47 = scmp.eq.s32.totalorder %s16, 1
    %p48 = por %p46, %p47
    %p49 = scmp.ne.s32.totalorder %s38, %s39
    %p50 = scmp.eq.s32.totalorder %s16, 0
    %p51 = por %p49, %p50
    %p52 = scmp.ne.s32.totalorder %s38, %s39
    %p53 = scmp.eq.s32.totalorder %s17, 1
    %p54 = por %p52, %p53
    %p56 = scmp.ne.s32.totalorder %s39, %s55
    %p57 = scmp.eq.s32.totalorder %s17, 0
    %p58 = por %p56, %p57
    %s60 = sadd.s32 %s59, 1
    %p63 = scmp.eq.s32.totalorder %s11, 1
    %p64 = scmp.ne.s32.totalorder %s59, %s61
    %p65 = scmp.eq.s32.totalorder %s11, 0
    %p66 = por %p64, %p65
    %p67 = scmp.ne.s32.totalorder %s59, %s61
    %p68 = scmp.eq.s32.totalorder %s16, 1
    %p69 = por %p67, %p68
    %p70 = scmp.ne.s32.totalorder %s61, %s62
    %p71 = scmp.eq.s32.totalorder %s16, 0
    %p72 = por %p70, %p71
    %p73 = scmp.ne.s32.totalorder %s61, %s62
    %p74 = scmp.eq.s32.totalorder %s17, 1
    %p75 = por %p73, %p74
    %p77 = scmp.ne.s32.totalorder %s62, %s76
    %p78 = scmp.eq.s32.totalorder %s17, 0
    %p79 = por %p77, %p78
    %s81 = sadd.s32 %s80, 1
    %p84 = scmp.eq.s32.totalorder %s11, 1
    %p85 = scmp.ne.s32.totalorder %s80, %s82
    %p86 = scmp.eq.s32.totalorder %s11, 0
    %p87 = por %p85, %p86
    %p88 = scmp.ne.s32.totalorder %s80, %s82
    %p89 = scmp.eq.s32.totalorder %s16, 1
    %p90 = por %p88, %p89
    %p91 = scmp.ne.s32.totalorder %s82, %s83
    %p92 = scmp.eq.s32.totalorder %s16, 0
    %p93 = por %p91, %p92
    %p94 = scmp.ne.s32.totalorder %s82, %s83
    %p95 = scmp.eq.s32.totalorder %s17, 1
    %p96 = por %p94, %p95
    %p98 = scmp.ne.s32.totalorder %s83, %s97
    %p99 = scmp.eq.s32.totalorder %s17, 0
    %p100 = por %p98, %p99
    %s102 = sadd.s32 %s101, 1
    %p105 = scmp.eq.s32.totalorder %s11, 1
    %p106 = scmp.ne.s32.totalorder %s101, %s103
    %p107 = scmp.eq.s32.totalorder %s11, 0
    %p108 = por %p106, %p107
    %p109 = scmp.ne.s32.totalorder %s101, %s103
    %p110 = scmp.eq.s32.totalorder %s16, 1
    %p111 = por %p109, %p110
    %p112 = scmp.ne.s32.totalorder %s103, %s104
    %p113 = scmp.eq.s32.totalorder %s16, 0
    %p114 = por %p112, %p113
    %p115 = scmp.ne.s32.totalorder %s103, %s104
    %p116 = scmp.eq.s32.totalorder %s17, 1
    %p117 = por %p115, %p116
    %p119 = scmp.ne.s32.totalorder %s104, %s118
    %p120 = scmp.eq.s32.totalorder %s17, 0
    %p121 = por %p119, %p120
    %s123 = sadd.s32 %s122, 1
    %p126 = scmp.eq.s32.totalorder %s11, 1
    %p127 = scmp.ne.s32.totalorder %s122, %s124
    %p128 = scmp.eq.s32.totalorder %s11, 0
    %p129 = por %p127, %p128
    %p130 = scmp.ne.s32.totalorder %s122, %s124
    %p131 = scmp.eq.s32.totalorder %s16, 1
    %p132 = por %p130, %p131
    %p133 = scmp.ne.s32.totalorder %s124, %s125
    %p134 = scmp.eq.s32.totalorder %s16, 0
    %p135 = por %p133, %p134
    %p136 = scmp.ne.s32.totalorder %s124, %s125
    %p137 = scmp.eq.s32.totalorder %s17, 1
    %p138 = por %p136, %p137
    %p140 = scmp.ne.s32.totalorder %s125, %s139
    %p141 = scmp.eq.s32.totalorder %s17, 0
    %p142 = por %p140, %p141
    %s143 = ssub.s32 %s18, %s30
    %s144 = ssub.s32 %s19, %s26
    %s145 = sor.u32 %s143, %s144
    %p146 = scmp.eq.s32.totalorder %s145, 0
    %s148 = sadd.s32 %s147, 1
    %s149 = scalar_select %p146, %s147, %s148
    %p152 = pneg %p146
    %p153 = scmp.eq.s32.totalorder %s11, 1
    %p154 = por %p152, %p153
    %p155 = scmp.ne.s32.totalorder %s147, %s150
    %p156 = scmp.eq.s32.totalorder %s11, 0
    %p157 = por %p155, %p156
    %p158 = scmp.ne.s32.totalorder %s147, %s150
    %p159 = scmp.eq.s32.totalorder %s16, 1
    %p160 = por %p158, %p159
    %p161 = scmp.ne.s32.totalorder %s150, %s151
    %p162 = scmp.eq.s32.totalorder %s16, 0
    %p163 = por %p161, %p162
    %p164 = scmp.ne.s32.totalorder %s150, %s151
    %p165 = scmp.eq.s32.totalorder %s17, 1
    %p166 = por %p164, %p165
    %p168 = scmp.ne.s32.totalorder %s151, %s167
    %p169 = scmp.eq.s32.totalorder %s17, 0
    %p170 = por %p168, %p169
    %p171 = scmp.le.s32.totalorder 1, %s11
    %p172 = scmp.lt.s32.totalorder %s11, 3
    %p173 = pnand %p171, %p172
    %p174 = pneg %p173
    // Predicated region
    $region9: #{attention_block_forward.1} parent=5 // pred_check
      _
    $region10: #{attention_block_forward.1} parent=5 // pred_check_branch
      %176 = sbr.rel (%p173) target = $region12
    $region11: #{attention_block_forward.1} parent=5 // pred_region
      %s177 = ssub.s32 %s11, 1
      // Predicated region
      $region13: #{attention_block_forward.1} parent=11 // pred_check
        %p178 = pneg %p72
      $region14: #{attention_block_forward.1} parent=11 // pred_check_branch
        %180 = sbr.rel (%p178) target = $region16
      $region15: #{attention_block_forward.1} parent=11 // pred_region
        _
      $region16: #{attention_block_forward.1} parent=11 // pred_fallthru
        _
      // Predicated region
      $region17: #{attention_block_forward.1} parent=11 // pred_check
        %p181 = pneg %p93
      $region18: #{attention_block_forward.1} parent=11 // pred_check_branch
        %183 = sbr.rel (%p181) target = $region20
      $region19: #{attention_block_forward.1} parent=11 // pred_region
        _
      $region20: #{attention_block_forward.1} parent=11 // pred_fallthru
        _
      // Predicated region
      $region21: #{attention_block_forward.1} parent=11 // pred_check
        %p184 = pneg %p114
      $region22: #{attention_block_forward.1} parent=11 // pred_check_branch
        %186 = sbr.rel (%p184) target = $region24
      $region23: #{attention_block_forward.1} parent=11 // pred_region
        _
      $region24: #{attention_block_forward.1} parent=11 // pred_fallthru
        _
      // Predicated region
      $region25: #{attention_block_forward.1} parent=11 // pred_check
        %p187 = pneg %p135
      $region26: #{attention_block_forward.1} parent=11 // pred_check_branch
        %189 = sbr.rel (%p187) target = $region28
      $region27: #{attention_block_forward.1} parent=11 // pred_region
        _
      $region28: #{attention_block_forward.1} parent=11 // pred_fallthru
        _
    $region12: #{attention_block_forward.1} parent=5 // pred_fallthru
      _
    %p190 = scmp.lt.s32.totalorder %s11, 2
    // Predicated region
    $region29: #{attention_block_forward.1} parent=5 // pred_check
      %p191 = pneg %p190
    $region30: #{attention_block_forward.1} parent=5 // pred_check_branch
      %193 = sbr.rel (%p191) target = $region32
    $region31: #{attention_block_forward.1} parent=5 // pred_region
      // Predicated region
      $region33: #{attention_block_forward.1} parent=31 // pred_check
        %p194 = pneg %p45
      $region34: #{attention_block_forward.1} parent=31 // pred_check_branch
        %196 = sbr.rel (%p194) target = $region36
      $region35: #{attention_block_forward.1} parent=31 // pred_region
        %s197 = smul.u32 2, %s19
        %p198 = scmp.lt.s32.totalorder %s18, 1
        %s199 = scalar_select %p198, %s18, 1
        %p200 = scmp.lt.s32.totalorder %s197, 1
        %s201 = scalar_select %p200, %s197, 1
        %s202 = smul.addr %s199, 8
        %s203 = sadd.s32 %s201, %s202
        %s204 = smul.addr %s203, 8
        %s205 = scalar_lea.vmem %s0, %s204
        %s206 = smul.u32 2, %s19
      $region36: #{attention_block_forward.1} parent=31 // pred_fallthru
        _
    $region32: #{attention_block_forward.1} parent=5 // pred_fallthru
      _
    %p207 = scmp.le.s32.totalorder 1, %s11
    %p208 = scmp.lt.s32.totalorder %s11, 3
    %p209 = pnand %p207, %p208
    %p210 = pneg %p209
    // Predicated region
    $region37: #{attention_block_forward.1} parent=5 // pred_check
      _
    $region38: #{attention_block_forward.1} parent=5 // pred_check_branch
      %212 = sbr.rel (%p209) target = $region40
    $region39: #{attention_block_forward.1} parent=5 // pred_region
      %s213 = ssub.s32 %s11, 1
      %s214 = smul.u32 2, %s21
      %p215 = scmp.lt.s32.totalorder %s20, 1
      %s216 = scalar_select %p215, %s20, 1
      %p217 = scmp.lt.s32.totalorder %s214, 1
      %s218 = scalar_select %p217, %s214, 1
      %s219 = smul.addr %s216, 8
      %s220 = sadd.s32 %s218, %s219
      %s221 = smul.addr %s220, 8
      %s222 = scalar_lea.vmem %s0, %s221
      %p223 = pneg %p51
      %p224 = pneg %p48
      %p225 = pneg %p72
      %p226 = pneg %p69
      %p227 = pneg %p93
      %p228 = pneg %p90
      %p229 = pneg %p114
      %p230 = pneg %p111
      %p231 = pneg %p135
      %p232 = pneg %p132
      %p233 = pneg %p163
      %p234 = pneg %p160
      %s235 = smul.u32 2, %s21
      %p236 = scmp.lt.s32.totalorder %s20, 1
      %s237 = scalar_select %p236, %s20, 1
      %p238 = scmp.lt.s32.totalorder %s235, 1
      %s239 = scalar_select %p238, %s235, 1
      %s240 = smul.addr %s237, 8
      %s241 = sadd.s32 %s239, %s240
      %s242 = smul.addr %s241, 8
      %s243 = scalar_lea.vmem %s5, %s242
      %s244 = smul.u32 2, %s21
      %p245 = scmp.lt.s32.totalorder %s20, 1
      %s246 = scalar_select %p245, %s20, 1
      %p247 = scmp.lt.s32.totalorder %s244, 1
      %s248 = scalar_select %p247, %s244, 1
      %s249 = smul.addr %s246, 8
      %s250 = sadd.s32 %s248, %s249
      %s251 = smul.addr %s250, 8
      %s252 = scalar_lea.vmem %s0, %s251
      %s253 = smul.u32 2, %s21
      %s254 = smul.u32 2, %s21
      %p255 = scmp.lt.s32.totalorder %s20, 1
      %s256 = scalar_select %p255, %s20, 1
      %p257 = scmp.lt.s32.totalorder %s254, 1
      %s258 = scalar_select %p257, %s254, 1
      %s259 = smul.addr %s256, 8
      %s260 = sadd.s32 %s258, %s259
      %s261 = smul.addr %s260, 8
      %s262 = scalar_lea.vmem %s5, %s261
      %s263 = smul.u32 2, %s21
      %v265 = vld [vmem:[%s252] sm:$0xff]
      %v266 = vld [vmem:[%s252 + $0x8] sm:$0xff]
      %v267 = vld [vmem:[%s252 + $0x10] sm:$0xff]
      %v268 = vld [vmem:[%s252 + $0x18] sm:$0xff]
      %v269 = vld [vmem:[%s252 + $0x20] sm:$0xff]
      %v270 = vld [vmem:[%s252 + $0x28] sm:$0xff]
      %v271 = vld [vmem:[%s252 + $0x30] sm:$0xff]
      %v272 = vld [vmem:[%s252 + $0x38] sm:$0xff]
      %v273 = vld [vmem:[%s1] sm:$0xf]
      %v274 = vld [vmem:[%s1 + $0x4] sm:$0xf]
      %v275 = vld [vmem:[%s1 + $0x8] sm:$0xf]
      %v276 = vld [vmem:[%s1 + $0xc] sm:$0xf]
      %v277 = vld [vmem:[%s1 + $0x10] sm:$0xf]
      %v278 = vld [vmem:[%s1 + $0x14] sm:$0xf]
      %v279 = vld [vmem:[%s1 + $0x18] sm:$0xf]
      %v280 = vld [vmem:[%s1 + $0x1c] sm:$0xf]
      %v281 = vld [vmem:[%s1 + $0x20] sm:$0xf]
      %v282 = vld [vmem:[%s1 + $0x24] sm:$0xf]
      %v283 = vld [vmem:[%s1 + $0x28] sm:$0xf]
      %v284 = vld [vmem:[%s1 + $0x2c] sm:$0xf]
      %v285 = vld [vmem:[%s1 + $0x30] sm:$0xf]
      %v286 = vld [vmem:[%s1 + $0x34] sm:$0xf]
      %v287 = vld [vmem:[%s1 + $0x38] sm:$0xf]
      %v288 = vld [vmem:[%s1 + $0x3c] sm:$0xf]
      %v289 = vld [vmem:[%s1 + $0x40] sm:$0xf]
      %v290 = vld [vmem:[%s1 + $0x44] sm:$0xf]
      %v291 = vld [vmem:[%s1 + $0x48] sm:$0xf]
      %v292 = vld [vmem:[%s1 + $0x4c] sm:$0xf]
      %v293 = vld [vmem:[%s1 + $0x50] sm:$0xf]
      %v294 = vld [vmem:[%s1 + $0x54] sm:$0xf]
      %v295 = vld [vmem:[%s1 + $0x58] sm:$0xf]
      %v296 = vld [vmem:[%s1 + $0x5c] sm:$0xf]
      %v297 = vld [vmem:[%s1 + $0x60] sm:$0xf]
      %v298 = vld [vmem:[%s1 + $0x64] sm:$0xf]
      %v299 = vld [vmem:[%s1 + $0x68] sm:$0xf]
      %v300 = vld [vmem:[%s1 + $0x6c] sm:$0xf]
      %v301 = vld [vmem:[%s1 + $0x70] sm:$0xf]
      %v302 = vld [vmem:[%s1 + $0x74] sm:$0xf]
      %v303 = vld [vmem:[%s1 + $0x78] sm:$0xf]
      %v304 = vld [vmem:[%s1 + $0x7c] sm:$0xf]
      %v305 = vld [vmem:[%s1 + $0x80] sm:$0xf]
      %v306 = vld [vmem:[%s1 + $0x84] sm:$0xf]
      %v307 = vld [vmem:[%s1 + $0x88] sm:$0xf]
      %v308 = vld [vmem:[%s1 + $0x8c] sm:$0xf]
      %v309 = vld [vmem:[%s1 + $0x90] sm:$0xf]
      %v310 = vld [vmem:[%s1 + $0x94] sm:$0xf]
      %v311 = vld [vmem:[%s1 + $0x98] sm:$0xf]
      %v312 = vld [vmem:[%s1 + $0x9c] sm:$0xf]
      %v313 = vld [vmem:[%s1 + $0xa0] sm:$0xf]
      %v314 = vld [vmem:[%s1 + $0xa4] sm:$0xf]
      %v315 = vld [vmem:[%s1 + $0xa8] sm:$0xf]
      %v316 = vld [vmem:[%s1 + $0xac] sm:$0xf]
      %v317 = vld [vmem:[%s1 + $0xb0] sm:$0xf]
      %v318 = vld [vmem:[%s1 + $0xb4] sm:$0xf]
      %v319 = vld [vmem:[%s1 + $0xb8] sm:$0xf]
      %v320 = vld [vmem:[%s1 + $0xbc] sm:$0xf]
      %v321 = vld [vmem:[%s2] sm:$0xff]
      %v322 = vld [vmem:[%s2 + $0x8] sm:$0xff]
      %v323 = vld [vmem:[%s2 + $0x10] sm:$0xff]
      %v324 = vld [vmem:[%s2 + $0x18] sm:$0xff]
      %v325 = vld [vmem:[%s2 + $0x20] sm:$0xff]
      %v326 = vld [vmem:[%s2 + $0x28] sm:$0xff]
      %v327 = vld [vmem:[%s2 + $0x30] sm:$0xff]
      %v328 = vld [vmem:[%s2 + $0x38] sm:$0xff]
      %v329 = vld [vmem:[%s2 + $0x40] sm:$0xff]
      %v330 = vld [vmem:[%s2 + $0x48] sm:$0xff]
      %v331 = vld [vmem:[%s2 + $0x50] sm:$0xff]
      %v332 = vld [vmem:[%s2 + $0x58] sm:$0xff]
      %v333 = vld [vmem:[%s2 + $0x60] sm:$0xff]
      %v334 = vld [vmem:[%s2 + $0x68] sm:$0xff]
      %v335 = vld [vmem:[%s2 + $0x70] sm:$0xff]
      %v336 = vld [vmem:[%s2 + $0x78] sm:$0xff]
      %v337 = vld [vmem:[%s2 + $0x80] sm:$0xff]
      %v338 = vld [vmem:[%s2 + $0x88] sm:$0xff]
      %v339 = vld [vmem:[%s2 + $0x90] sm:$0xff]
      %v340 = vld [vmem:[%s2 + $0x98] sm:$0xff]
      %v341 = vld [vmem:[%s2 + $0xa0] sm:$0xff]
      %v342 = vld [vmem:[%s2 + $0xa8] sm:$0xff]
      %v343 = vld [vmem:[%s2 + $0xb0] sm:$0xff]
      %v344 = vld [vmem:[%s2 + $0xb8] sm:$0xff]
      %v345 = vld [vmem:[%s2 + $0xc0] sm:$0xff]
      %v346 = vld [vmem:[%s2 + $0xc8] sm:$0xff]
      %v347 = vld [vmem:[%s2 + $0xd0] sm:$0xff]
      %v348 = vld [vmem:[%s2 + $0xd8] sm:$0xff]
      %v349 = vld [vmem:[%s2 + $0xe0] sm:$0xff]
      %v350 = vld [vmem:[%s2 + $0xe8] sm:$0xff]
      %v351 = vld [vmem:[%s2 + $0xf0] sm:$0xff]
      %v352 = vld [vmem:[%s2 + $0xf8] sm:$0xff]
      %v353 = vld [vmem:[%s2 + $0x100] sm:$0xff]
      %v354 = vld [vmem:[%s2 + $0x108] sm:$0xff]
      %v355 = vld [vmem:[%s2 + $0x110] sm:$0xff]
      %v356 = vld [vmem:[%s2 + $0x118] sm:$0xff]
      %v357 = vld [vmem:[%s2 + $0x120] sm:$0xff]
      %v358 = vld [vmem:[%s2 + $0x128] sm:$0xff]
      %v359 = vld [vmem:[%s2 + $0x130] sm:$0xff]
      %v360 = vld [vmem:[%s2 + $0x138] sm:$0xff]
      %v361 = vld [vmem:[%s2 + $0x140] sm:$0xff]
      %v362 = vld [vmem:[%s2 + $0x148] sm:$0xff]
      %v363 = vld [vmem:[%s2 + $0x150] sm:$0xff]
      %v364 = vld [vmem:[%s2 + $0x158] sm:$0xff]
      %v365 = vld [vmem:[%s2 + $0x160] sm:$0xff]
      %v366 = vld [vmem:[%s2 + $0x168] sm:$0xff]
      %v367 = vld [vmem:[%s2 + $0x170] sm:$0xff]
      %v368 = vld [vmem:[%s2 + $0x178] sm:$0xff]
      %v369 = vld [vmem:[%s3] sm:$0xf]
      %v370 = vld [vmem:[%s3 + $0x4] sm:$0xf]
      %v371 = vld [vmem:[%s3 + $0x8] sm:$0xf]
      %v372 = vld [vmem:[%s3 + $0xc] sm:$0xf]
      %v373 = vld [vmem:[%s4] sm:$0xff]
      %v374 = vld [vmem:[%s4 + $0x8] sm:$0xff]
      %v375 = vld [vmem:[%s4 + $0x10] sm:$0xff]
      %v376 = vld [vmem:[%s4 + $0x18] sm:$0xff]
      %v377 = vpack.c.bf16 %v267, %v265
      %v378 = vpack.c.bf16 %v268, %v266
      %v379 = vpack.c.bf16 %v271, %v269
      %v380 = vpack.c.bf16 %v272, %v270
      %382 = vset.pattern.permute.xlu0 0
      %383 = vperm.xlu0 %382, %v321
      %v384 = vpop.permute.xlu0 %383
      %387 = vset.pattern.permute.xlu0 0
      %388 = vperm.xlu0 %387, %v322
      %v389 = vpop.permute.xlu0 %388
      %392 = vset.pattern.permute.xlu0 0
      %393 = vperm.xlu0 %392, %v323
      %v394 = vpop.permute.xlu0 %393
      %397 = vset.pattern.permute.xlu0 0
      %398 = vperm.xlu0 %397, %v324
      %v399 = vpop.permute.xlu0 %398
      %402 = vset.pattern.permute.xlu0 0
      %403 = vperm.xlu0 %402, %v325
      %v404 = vpop.permute.xlu0 %403
      %407 = vset.pattern.permute.xlu0 0
      %408 = vperm.xlu0 %407, %v326
      %v409 = vpop.permute.xlu0 %408
      %412 = vset.pattern.permute.xlu0 0
      %413 = vperm.xlu0 %412, %v327
      %v414 = vpop.permute.xlu0 %413
      %417 = vset.pattern.permute.xlu0 0
      %418 = vperm.xlu0 %417, %v328
      %v419 = vpop.permute.xlu0 %418
      %422 = vset.pattern.permute.xlu0 0
      %423 = vperm.xlu0 %422, %v329
      %v424 = vpop.permute.xlu0 %423
      %427 = vset.pattern.permute.xlu0 0
      %428 = vperm.xlu0 %427, %v330
      %v429 = vpop.permute.xlu0 %428
      %432 = vset.pattern.permute.xlu0 0
      %433 = vperm.xlu0 %432, %v331
      %v434 = vpop.permute.xlu0 %433
      %437 = vset.pattern.permute.xlu0 0
      %438 = vperm.xlu0 %437, %v332
      %v439 = vpop.permute.xlu0 %438
      %442 = vset.pattern.permute.xlu0 0
      %443 = vperm.xlu0 %442, %v333
      %v444 = vpop.permute.xlu0 %443
      %447 = vset.pattern.permute.xlu0 0
      %448 = vperm.xlu0 %447, %v334
      %v449 = vpop.permute.xlu0 %448
      %452 = vset.pattern.permute.xlu0 0
      %453 = vperm.xlu0 %452, %v335
      %v454 = vpop.permute.xlu0 %453
      %457 = vset.pattern.permute.xlu0 0
      %458 = vperm.xlu0 %457, %v336
      %v459 = vpop.permute.xlu0 %458
      %462 = vset.pattern.permute.xlu0 0
      %463 = vperm.xlu0 %462, %v337
      %v464 = vpop.permute.xlu0 %463
      %467 = vset.pattern.permute.xlu0 0
      %468 = vperm.xlu0 %467, %v338
      %v469 = vpop.permute.xlu0 %468
      %472 = vset.pattern.permute.xlu0 0
      %473 = vperm.xlu0 %472, %v339
      %v474 = vpop.permute.xlu0 %473
      %477 = vset.pattern.permute.xlu0 0
      %478 = vperm.xlu0 %477, %v340
      %v479 = vpop.permute.xlu0 %478
      %482 = vset.pattern.permute.xlu0 0
      %483 = vperm.xlu0 %482, %v341
      %v484 = vpop.permute.xlu0 %483
      %487 = vset.pattern.permute.xlu0 0
      %488 = vperm.xlu0 %487, %v342
      %v489 = vpop.permute.xlu0 %488
      %492 = vset.pattern.permute.xlu0 0
      %493 = vperm.xlu0 %492, %v343
      %v494 = vpop.permute.xlu0 %493
      %497 = vset.pattern.permute.xlu0 0
      %498 = vperm.xlu0 %497, %v344
      %v499 = vpop.permute.xlu0 %498
      %502 = vset.pattern.permute.xlu0 0
      %503 = vperm.xlu0 %502, %v345
      %v504 = vpop.permute.xlu0 %503
      %507 = vset.pattern.permute.xlu0 0
      %508 = vperm.xlu0 %507, %v346
      %v509 = vpop.permute.xlu0 %508
      %512 = vset.pattern.permute.xlu0 0
      %513 = vperm.xlu0 %512, %v347
      %v514 = vpop.permute.xlu0 %513
      %517 = vset.pattern.permute.xlu0 0
      %518 = vperm.xlu0 %517, %v348
      %v519 = vpop.permute.xlu0 %518
      %522 = vset.pattern.permute.xlu0 0
      %523 = vperm.xlu0 %522, %v349
      %v524 = vpop.permute.xlu0 %523
      %527 = vset.pattern.permute.xlu0 0
      %528 = vperm.xlu0 %527, %v350
      %v529 = vpop.permute.xlu0 %528
      %532 = vset.pattern.permute.xlu0 0
      %533 = vperm.xlu0 %532, %v351
      %v534 = vpop.permute.xlu0 %533
      %537 = vset.pattern.permute.xlu0 0
      %538 = vperm.xlu0 %537, %v352
      %v539 = vpop.permute.xlu0 %538
      %542 = vset.pattern.permute.xlu0 0
      %543 = vperm.xlu0 %542, %v353
      %v544 = vpop.permute.xlu0 %543
      %547 = vset.pattern.permute.xlu0 0
      %548 = vperm.xlu0 %547, %v354
      %v549 = vpop.permute.xlu0 %548
      %552 = vset.pattern.permute.xlu0 0
      %553 = vperm.xlu0 %552, %v355
      %v554 = vpop.permute.xlu0 %553
      %557 = vset.pattern.permute.xlu0 0
      %558 = vperm.xlu0 %557, %v356
      %v559 = vpop.permute.xlu0 %558
      %562 = vset.pattern.permute.xlu0 0
      %563 = vperm.xlu0 %562, %v357
      %v564 = vpop.permute.xlu0 %563
      %567 = vset.pattern.permute.xlu0 0
      %568 = vperm.xlu0 %567, %v358
      %v569 = vpop.permute.xlu0 %568
      %572 = vset.pattern.permute.xlu0 0
      %573 = vperm.xlu0 %572, %v359
      %v574 = vpop.permute.xlu0 %573
      %577 = vset.pattern.permute.xlu0 0
      %578 = vperm.xlu0 %577, %v360
      %v579 = vpop.permute.xlu0 %578
      %582 = vset.pattern.permute.xlu0 0
      %583 = vperm.xlu0 %582, %v361
      %v584 = vpop.permute.xlu0 %583
      %587 = vset.pattern.permute.xlu0 0
      %588 = vperm.xlu0 %587, %v362
      %v589 = vpop.permute.xlu0 %588
      %592 = vset.pattern.permute.xlu0 0
      %593 = vperm.xlu0 %592, %v363
      %v594 = vpop.permute.xlu0 %593
      %597 = vset.pattern.permute.xlu0 0
      %598 = vperm.xlu0 %597, %v364
      %v599 = vpop.permute.xlu0 %598
      %602 = vset.pattern.permute.xlu0 0
      %603 = vperm.xlu0 %602, %v365
      %v604 = vpop.permute.xlu0 %603
      %607 = vset.pattern.permute.xlu0 0
      %608 = vperm.xlu0 %607, %v366
      %v609 = vpop.permute.xlu0 %608
      %612 = vset.pattern.permute.xlu0 0
      %613 = vperm.xlu0 %612, %v367
      %v614 = vpop.permute.xlu0 %613
      %617 = vset.pattern.permute.xlu0 0
      %618 = vperm.xlu0 %617, %v368
      %v619 = vpop.permute.xlu0 %618
      %v669 = vunpack.c.l.b16 %v273
      %v670 = vunpack.c.l.b16 %v274
      %v671 = vunpack.c.l.b16 %v275
      %v672 = vunpack.c.l.b16 %v276
      %v673 = vunpack.c.l.b16 %v277
      %v674 = vunpack.c.l.b16 %v278
      %v675 = vunpack.c.l.b16 %v279
      %v676 = vunpack.c.l.b16 %v280
      %v677 = vunpack.c.l.b16 %v281
      %v678 = vunpack.c.l.b16 %v282
      %v679 = vunpack.c.l.b16 %v283
      %v680 = vunpack.c.l.b16 %v284
      %v681 = vunpack.c.l.b16 %v285
      %v682 = vunpack.c.l.b16 %v286
      %v683 = vunpack.c.l.b16 %v287
      %v684 = vunpack.c.l.b16 %v288
      %v685 = vunpack.c.l.b16 %v289
      %v686 = vunpack.c.l.b16 %v290
      %v687 = vunpack.c.l.b16 %v291
      %v688 = vunpack.c.l.b16 %v292
      %v689 = vunpack.c.l.b16 %v293
      %v690 = vunpack.c.l.b16 %v294
      %v691 = vunpack.c.l.b16 %v295
      %v692 = vunpack.c.l.b16 %v296
      %v693 = vunpack.c.l.b16 %v297
      %v694 = vunpack.c.l.b16 %v298
      %v695 = vunpack.c.l.b16 %v299
      %v696 = vunpack.c.l.b16 %v300
      %v697 = vunpack.c.l.b16 %v301
      %v698 = vunpack.c.l.b16 %v302
      %v699 = vunpack.c.l.b16 %v303
      %v700 = vunpack.c.l.b16 %v304
      %v701 = vunpack.c.l.b16 %v305
      %v702 = vunpack.c.l.b16 %v306
      %v703 = vunpack.c.l.b16 %v307
      %v704 = vunpack.c.l.b16 %v308
      %v705 = vunpack.c.l.b16 %v309
      %v706 = vunpack.c.l.b16 %v310
      %v707 = vunpack.c.l.b16 %v311
      %v708 = vunpack.c.l.b16 %v312
      %v709 = vunpack.c.l.b16 %v313
      %v710 = vunpack.c.l.b16 %v314
      %v711 = vunpack.c.l.b16 %v315
      %v712 = vunpack.c.l.b16 %v316
      %v713 = vunpack.c.l.b16 %v317
      %v714 = vunpack.c.l.b16 %v318
      %v715 = vunpack.c.l.b16 %v319
      %v716 = vunpack.c.l.b16 %v320
      %v717 = vpack.c.b16 %v670, %v669
      %v718 = vpack.c.b16 %v672, %v671
      %v719 = vpack.c.b16 %v674, %v673
      %v720 = vpack.c.b16 %v676, %v675
      %v721 = vpack.c.b16 %v678, %v677
      %v722 = vpack.c.b16 %v680, %v679
      %v723 = vpack.c.b16 %v682, %v681
      %v724 = vpack.c.b16 %v684, %v683
      %v725 = vpack.c.b16 %v686, %v685
      %v726 = vpack.c.b16 %v688, %v687
      %v727 = vpack.c.b16 %v690, %v689
      %v728 = vpack.c.b16 %v692, %v691
      %v729 = vpack.c.b16 %v694, %v693
      %v730 = vpack.c.b16 %v696, %v695
      %v731 = vpack.c.b16 %v698, %v697
      %v732 = vpack.c.b16 %v700, %v699
      %v733 = vpack.c.b16 %v702, %v701
      %v734 = vpack.c.b16 %v704, %v703
      %v735 = vpack.c.b16 %v706, %v705
      %v736 = vpack.c.b16 %v708, %v707
      %v737 = vpack.c.b16 %v710, %v709
      %v738 = vpack.c.b16 %v712, %v711
      %v739 = vpack.c.b16 %v714, %v713
      %v740 = vpack.c.b16 %v716, %v715
      %vm741 = vcmask 261120
      %v743 = vsel %vm741, %v717, 0
      %v746 = vsel %vm741, %v718, 0
      %v749 = vsel %vm741, %v719, 0
      %v752 = vsel %vm741, %v720, 0
      %v755 = vsel %vm741, %v721, 0
      %v758 = vsel %vm741, %v722, 0
      %v761 = vsel %vm741, %v723, 0
      %v764 = vsel %vm741, %v724, 0
      %v767 = vsel %vm741, %v725, 0
      %v770 = vsel %vm741, %v726, 0
      %v773 = vsel %vm741, %v727, 0
      %v776 = vsel %vm741, %v728, 0
      %v779 = vsel %vm741, %v729, 0
      %v782 = vsel %vm741, %v730, 0
      %v785 = vsel %vm741, %v731, 0
      %v788 = vsel %vm741, %v732, 0
      %v791 = vsel %vm741, %v733, 0
      %v794 = vsel %vm741, %v734, 0
      %v797 = vsel %vm741, %v735, 0
      %v800 = vsel %vm741, %v736, 0
      %v803 = vsel %vm741, %v737, 0
      %v806 = vsel %vm741, %v738, 0
      %v809 = vsel %vm741, %v739, 0
      %v812 = vsel %vm741, %v740, 0
      %814 = vmatpush.bf16.msra.mxu0 0
      %815 = vmatpush.bf16.msra.mxu0 0
      %816 = vmatpush.bf16.msra.mxu0 0
      %817 = vmatpush.bf16.msra.mxu0 0
      %818 = vmatpush.bf16.msra.mxu0 0
      %819 = vmatpush.bf16.msra.mxu0 0
      %820 = vmatpush.bf16.msra.mxu0 %v379
      %821 = vmatpush.bf16.msra.mxu0 %v377
      %822 = vmatmul.bf16.gmra.mxu0 %v743
      %v823 = vpop.f32.mrf.mxu0
      %v824 = vadd.f32 %v384, %v823
      %v825 = vpop.f32.mrf.mxu0
      %v826 = vadd.f32 %v389, %v825
      %827 = vmatmul.bf16.gmra.mxu0 %v746
      %v828 = vpop.f32.mrf.mxu0
      %v829 = vadd.f32 %v394, %v828
      %v830 = vpop.f32.mrf.mxu0
      %v831 = vadd.f32 %v399, %v830
      %832 = vmatmul.bf16.gmra.mxu0 %v749
      %v833 = vpop.f32.mrf.mxu0
      %v834 = vadd.f32 %v404, %v833
      %v835 = vpop.f32.mrf.mxu0
      %v836 = vadd.f32 %v409, %v835
      %837 = vmatmul.bf16.gmra.mxu0 %v752
      %v838 = vpop.f32.mrf.mxu0
      %v839 = vadd.f32 %v414, %v838
      %v840 = vpop.f32.mrf.mxu0
      %v841 = vadd.f32 %v419, %v840
      %842 = vmatmul.bf16.gmra.mxu0 %v755
      %v843 = vpop.f32.mrf.mxu0
      %v844 = vadd.f32 %v424, %v843
      %v845 = vpop.f32.mrf.mxu0
      %v846 = vadd.f32 %v429, %v845
      %847 = vmatmul.bf16.gmra.mxu0 %v758
      %v848 = vpop.f32.mrf.mxu0
      %v849 = vadd.f32 %v434, %v848
      %v850 = vpop.f32.mrf.mxu0
      %v851 = vadd.f32 %v439, %v850
      %852 = vmatmul.bf16.gmra.mxu0 %v761
      %v853 = vpop.f32.mrf.mxu0
      %v854 = vadd.f32 %v444, %v853
      %v855 = vpop.f32.mrf.mxu0
      %v856 = vadd.f32 %v449, %v855
      %857 = vmatmul.bf16.gmra.mxu0 %v764
      %v858 = vpop.f32.mrf.mxu0
      %v859 = vadd.f32 %v454, %v858
      %v860 = vpop.f32.mrf.mxu0
      %v861 = vadd.f32 %v459, %v860
      %862 = vmatmul.bf16.gmra.mxu0 %v767
      %v863 = vpop.f32.mrf.mxu0
      %v864 = vadd.f32 %v464, %v863
      %v865 = vpop.f32.mrf.mxu0
      %v866 = vadd.f32 %v469, %v865
      %867 = vmatmul.bf16.gmra.mxu0 %v770
      %v868 = vpop.f32.mrf.mxu0
      %v869 = vadd.f32 %v474, %v868
      %v870 = vpop.f32.mrf.mxu0
      %v871 = vadd.f32 %v479, %v870
      %872 = vmatmul.bf16.gmra.mxu0 %v773
      %v873 = vpop.f32.mrf.mxu0
      %v874 = vadd.f32 %v484, %v873
      %v875 = vpop.f32.mrf.mxu0
      %v876 = vadd.f32 %v489, %v875
      %877 = vmatmul.bf16.gmra.mxu0 %v776
      %v878 = vpop.f32.mrf.mxu0
      %v879 = vadd.f32 %v494, %v878
      %v880 = vpop.f32.mrf.mxu0
      %v881 = vadd.f32 %v499, %v880
      %882 = vmatmul.bf16.gmra.mxu0 %v779
      %v883 = vpop.f32.mrf.mxu0
      %v884 = vadd.f32 %v504, %v883
      %v885 = vpop.f32.mrf.mxu0
      %v886 = vadd.f32 %v509, %v885
      %887 = vmatmul.bf16.gmra.mxu0 %v782
      %v888 = vpop.f32.mrf.mxu0
      %v889 = vadd.f32 %v514, %v888
      %v890 = vpop.f32.mrf.mxu0
      %v891 = vadd.f32 %v519, %v890
      %892 = vmatmul.bf16.gmra.mxu0 %v785
      %v893 = vpop.f32.mrf.mxu0
      %v894 = vadd.f32 %v524, %v893
      %v895 = vpop.f32.mrf.mxu0
      %v896 = vadd.f32 %v529, %v895
      %897 = vmatmul.bf16.gmra.mxu0 %v788
      %v898 = vpop.f32.mrf.mxu0
      %v899 = vadd.f32 %v534, %v898
      %v900 = vpop.f32.mrf.mxu0
      %v901 = vadd.f32 %v539, %v900
      %902 = vmatmul.bf16.gmra.mxu0 %v791
      %v903 = vpop.f32.mrf.mxu0
      %v904 = vadd.f32 %v544, %v903
      %v905 = vpop.f32.mrf.mxu0
      %v906 = vadd.f32 %v549, %v905
      %907 = vmatmul.bf16.gmra.mxu0 %v794
      %v908 = vpop.f32.mrf.mxu0
      %v909 = vadd.f32 %v554, %v908
      %v910 = vpop.f32.mrf.mxu0
      %v911 = vadd.f32 %v559, %v910
      %912 = vmatmul.bf16.gmra.mxu0 %v797
      %v913 = vpop.f32.mrf.mxu0
      %v914 = vadd.f32 %v564, %v913
      %v915 = vpop.f32.mrf.mxu0
      %v916 = vadd.f32 %v569, %v915
      %917 = vmatmul.bf16.gmra.mxu0 %v800
      %v918 = vpop.f32.mrf.mxu0
      %v919 = vadd.f32 %v574, %v918
      %v920 = vpop.f32.mrf.mxu0
      %v921 = vadd.f32 %v579, %v920
      %922 = vmatmul.bf16.gmra.mxu0 %v803
      %v923 = vpop.f32.mrf.mxu0
      %v924 = vadd.f32 %v584, %v923
      %v925 = vpop.f32.mrf.mxu0
      %v926 = vadd.f32 %v589, %v925
      %927 = vmatmul.bf16.gmra.mxu0 %v806
      %v928 = vpop.f32.mrf.mxu0
      %v929 = vadd.f32 %v594, %v928
      %v930 = vpop.f32.mrf.mxu0
      %v931 = vadd.f32 %v599, %v930
      %932 = vmatmul.bf16.gmra.mxu0 %v809
      %v933 = vpop.f32.mrf.mxu0
      %v934 = vadd.f32 %v604, %v933
      %v935 = vpop.f32.mrf.mxu0
      %v936 = vadd.f32 %v609, %v935
      %937 = vmatmul.bf16.gmra.mxu0 %v812
      %v938 = vpop.f32.mrf.mxu0
      %v939 = vadd.f32 %v614, %v938
      %v940 = vpop.f32.mrf.mxu0
      %v941 = vadd.f32 %v619, %v940
      %942 = vdwg.mxu0
      %943 = vmatpush.bf16.msra.mxu0 0
      %944 = vmatpush.bf16.msra.mxu0 0
      %945 = vmatpush.bf16.msra.mxu0 0
      %946 = vmatpush.bf16.msra.mxu0 0
      %947 = vmatpush.bf16.msra.mxu0 0
      %948 = vmatpush.bf16.msra.mxu0 0
      %949 = vmatpush.bf16.msra.mxu0 %v380
      %950 = vmatpush.bf16.msra.mxu0 %v378
      %951 = vmatmul.bf16.gmra.mxu0 %v743
      %v952 = vpop.f32.mrf.mxu0
      %v953 = vadd.f32 %v384, %v952
      %v954 = vpop.f32.mrf.mxu0
      %v955 = vadd.f32 %v389, %v954
      %956 = vmatmul.bf16.gmra.mxu0 %v746
      %v957 = vpop.f32.mrf.mxu0
      %v958 = vadd.f32 %v394, %v957
      %v959 = vpop.f32.mrf.mxu0
      %v960 = vadd.f32 %v399, %v959
      %961 = vmatmul.bf16.gmra.mxu0 %v749
      %v962 = vpop.f32.mrf.mxu0
      %v963 = vadd.f32 %v404, %v962
      %v964 = vpop.f32.mrf.mxu0
      %v965 = vadd.f32 %v409, %v964
      %966 = vmatmul.bf16.gmra.mxu0 %v752
      %v967 = vpop.f32.mrf.mxu0
      %v968 = vadd.f32 %v414, %v967
      %v969 = vpop.f32.mrf.mxu0
      %v970 = vadd.f32 %v419, %v969
      %971 = vmatmul.bf16.gmra.mxu0 %v755
      %v972 = vpop.f32.mrf.mxu0
      %v973 = vadd.f32 %v424, %v972
      %v974 = vpop.f32.mrf.mxu0
      %v975 = vadd.f32 %v429, %v974
      %976 = vmatmul.bf16.gmra.mxu0 %v758
      %v977 = vpop.f32.mrf.mxu0
      %v978 = vadd.f32 %v434, %v977
      %v979 = vpop.f32.mrf.mxu0
      %v980 = vadd.f32 %v439, %v979
      %981 = vmatmul.bf16.gmra.mxu0 %v761
      %v982 = vpop.f32.mrf.mxu0
      %v983 = vadd.f32 %v444, %v982
      %v984 = vpop.f32.mrf.mxu0
      %v985 = vadd.f32 %v449, %v984
      %986 = vmatmul.bf16.gmra.mxu0 %v764
      %v987 = vpop.f32.mrf.mxu0
      %v988 = vadd.f32 %v454, %v987
      %v989 = vpop.f32.mrf.mxu0
      %v990 = vadd.f32 %v459, %v989
      %991 = vmatmul.bf16.gmra.mxu0 %v767
      %v992 = vpop.f32.mrf.mxu0
      %v993 = vadd.f32 %v464, %v992
      %v994 = vpop.f32.mrf.mxu0
      %v995 = vadd.f32 %v469, %v994
      %996 = vmatmul.bf16.gmra.mxu0 %v770
      %v997 = vpop.f32.mrf.mxu0
      %v998 = vadd.f32 %v474, %v997
      %v999 = vpop.f32.mrf.mxu0
      %v1000 = vadd.f32 %v479, %v999
      %1001 = vmatmul.bf16.gmra.mxu0 %v773
      %v1002 = vpop.f32.mrf.mxu0
      %v1003 = vadd.f32 %v484, %v1002
      %v1004 = vpop.f32.mrf.mxu0
      %v1005 = vadd.f32 %v489, %v1004
      %1006 = vmatmul.bf16.gmra.mxu0 %v776
      %v1007 = vpop.f32.mrf.mxu0
      %v1008 = vadd.f32 %v494, %v1007
      %v1009 = vpop.f32.mrf.mxu0
      %v1010 = vadd.f32 %v499, %v1009
      %1011 = vmatmul.bf16.gmra.mxu0 %v779
      %v1012 = vpop.f32.mrf.mxu0
      %v1013 = vadd.f32 %v504, %v1012
      %v1014 = vpop.f32.mrf.mxu0
      %v1015 = vadd.f32 %v509, %v1014
      %1016 = vmatmul.bf16.gmra.mxu0 %v782
      %v1017 = vpop.f32.mrf.mxu0
      %v1018 = vadd.f32 %v514, %v1017
      %v1019 = vpop.f32.mrf.mxu0
      %v1020 = vadd.f32 %v519, %v1019
      %1021 = vmatmul.bf16.gmra.mxu0 %v785
      %v1022 = vpop.f32.mrf.mxu0
      %v1023 = vadd.f32 %v524, %v1022
      %v1024 = vpop.f32.mrf.mxu0
      %v1025 = vadd.f32 %v529, %v1024
      %1026 = vmatmul.bf16.gmra.mxu0 %v788
      %v1027 = vpop.f32.mrf.mxu0
      %v1028 = vadd.f32 %v534, %v1027
      %v1029 = vpop.f32.mrf.mxu0
      %v1030 = vadd.f32 %v539, %v1029
      %1031 = vmatmul.bf16.gmra.mxu0 %v791
      %v1032 = vpop.f32.mrf.mxu0
      %v1033 = vadd.f32 %v544, %v1032
      %v1034 = vpop.f32.mrf.mxu0
      %v1035 = vadd.f32 %v549, %v1034
      %1036 = vmatmul.bf16.gmra.mxu0 %v794
      %v1037 = vpop.f32.mrf.mxu0
      %v1038 = vadd.f32 %v554, %v1037
      %v1039 = vpop.f32.mrf.mxu0
      %v1040 = vadd.f32 %v559, %v1039
      %1041 = vmatmul.bf16.gmra.mxu0 %v797
      %v1042 = vpop.f32.mrf.mxu0
      %v1043 = vadd.f32 %v564, %v1042
      %v1044 = vpop.f32.mrf.mxu0
      %v1045 = vadd.f32 %v569, %v1044
      %1046 = vmatmul.bf16.gmra.mxu0 %v800
      %v1047 = vpop.f32.mrf.mxu0
      %v1048 = vadd.f32 %v574, %v1047
      %v1049 = vpop.f32.mrf.mxu0
      %v1050 = vadd.f32 %v579, %v1049
      %1051 = vmatmul.bf16.gmra.mxu0 %v803
      %v1052 = vpop.f32.mrf.mxu0
      %v1053 = vadd.f32 %v584, %v1052
      %v1054 = vpop.f32.mrf.mxu0
      %v1055 = vadd.f32 %v589, %v1054
      %1056 = vmatmul.bf16.gmra.mxu0 %v806
      %v1057 = vpop.f32.mrf.mxu0
      %v1058 = vadd.f32 %v594, %v1057
      %v1059 = vpop.f32.mrf.mxu0
      %v1060 = vadd.f32 %v599, %v1059
      %1061 = vmatmul.bf16.gmra.mxu0 %v809
      %v1062 = vpop.f32.mrf.mxu0
      %v1063 = vadd.f32 %v604, %v1062
      %v1064 = vpop.f32.mrf.mxu0
      %v1065 = vadd.f32 %v609, %v1064
      %1066 = vmatmul.bf16.gmra.mxu0 %v812
      %v1067 = vpop.f32.mrf.mxu0
      %v1068 = vadd.f32 %v614, %v1067
      %v1069 = vpop.f32.mrf.mxu0
      %v1070 = vadd.f32 %v619, %v1069
      %1071 = vdwg.mxu0
      %v1072 = vmul.f32 %v824, %v864
      %v1073 = vmul.f32 %v953, %v993
      %v1074 = vmul.f32 %v826, %v866
      %v1075 = vmul.f32 %v955, %v995
      %v1076 = vmul.f32 %v829, %v869
      %v1077 = vmul.f32 %v958, %v998
      %v1078 = vmul.f32 %v831, %v871
      %v1079 = vmul.f32 %v960, %v1000
      %v1080 = vmul.f32 %v834, %v864
      %v1081 = vmul.f32 %v963, %v993
      %v1082 = vmul.f32 %v836, %v866
      %v1083 = vmul.f32 %v965, %v995
      %v1084 = vmul.f32 %v839, %v869
      %v1085 = vmul.f32 %v968, %v998
      %v1086 = vmul.f32 %v841, %v871
      %v1087 = vmul.f32 %v970, %v1000
      %v1088 = vmul.f32 %v844, %v864
      %v1089 = vmul.f32 %v973, %v993
      %v1090 = vmul.f32 %v846, %v866
      %v1091 = vmul.f32 %v975, %v995
      %v1092 = vmul.f32 %v849, %v869
      %v1093 = vmul.f32 %v978, %v998
      %v1094 = vmul.f32 %v851, %v871
      %v1095 = vmul.f32 %v980, %v1000
      %v1096 = vmul.f32 %v854, %v864
      %v1097 = vmul.f32 %v983, %v993
      %v1098 = vmul.f32 %v856, %v866
      %v1099 = vmul.f32 %v985, %v995
      %v1100 = vmul.f32 %v859, %v869
      %v1101 = vmul.f32 %v988, %v998
      %v1102 = vmul.f32 %v861, %v871
      %v1103 = vmul.f32 %v990, %v1000
      %v1104 = vadd.f32 %v1072, %v1074
      %v1105 = vadd.f32 %v1104, %v1076
      %v1106 = vadd.f32 %v1105, %v1078
      %v1107 = vrot.slane %v1106, 4
      %v1108 = vadd.f32 %v1106, %v1107
      %v1109 = vrot.slane %v1108, 2
      %v1110 = vadd.f32 %v1108, %v1109
      %v1111 = vrot.slane %v1110, 1
      %v1112 = vadd.f32 %v1110, %v1111
      %v1113 = vadd.f32 %v1073, %v1075
      %v1114 = vadd.f32 %v1113, %v1077
      %v1115 = vadd.f32 %v1114, %v1079
      %v1116 = vrot.slane %v1115, 4
      %v1117 = vadd.f32 %v1115, %v1116
      %v1118 = vrot.slane %v1117, 2
      %v1119 = vadd.f32 %v1117, %v1118
      %v1120 = vrot.slane %v1119, 1
      %v1121 = vadd.f32 %v1119, %v1120
      %v1122 = vadd.f32 %v1080, %v1082
      %v1123 = vadd.f32 %v1122, %v1084
      %v1124 = vadd.f32 %v1123, %v1086
      %v1125 = vrot.slane %v1124, 4
      %v1126 = vadd.f32 %v1124, %v1125
      %v1127 = vrot.slane %v1126, 2
      %v1128 = vadd.f32 %v1126, %v1127
      %v1129 = vrot.slane %v1128, 1
      %v1130 = vadd.f32 %v1128, %v1129
      %v1131 = vadd.f32 %v1081, %v1083
      %v1132 = vadd.f32 %v1131, %v1085
      %v1133 = vadd.f32 %v1132, %v1087
      %v1134 = vrot.slane %v1133, 4
      %v1135 = vadd.f32 %v1133, %v1134
      %v1136 = vrot.slane %v1135, 2
      %v1137 = vadd.f32 %v1135, %v1136
      %v1138 = vrot.slane %v1137, 1
      %v1139 = vadd.f32 %v1137, %v1138
      %v1140 = vadd.f32 %v1088, %v1090
      %v1141 = vadd.f32 %v1140, %v1092
      %v1142 = vadd.f32 %v1141, %v1094
      %v1143 = vrot.slane %v1142, 4
      %v1144 = vadd.f32 %v1142, %v1143
      %v1145 = vrot.slane %v1144, 2
      %v1146 = vadd.f32 %v1144, %v1145
      %v1147 = vrot.slane %v1146, 1
      %v1148 = vadd.f32 %v1146, %v1147
      %v1149 = vadd.f32 %v1089, %v1091
      %v1150 = vadd.f32 %v1149, %v1093
      %v1151 = vadd.f32 %v1150, %v1095
      %v1152 = vrot.slane %v1151, 4
      %v1153 = vadd.f32 %v1151, %v1152
      %v1154 = vrot.slane %v1153, 2
      %v1155 = vadd.f32 %v1153, %v1154
      %v1156 = vrot.slane %v1155, 1
      %v1157 = vadd.f32 %v1155, %v1156
      %v1158 = vadd.f32 %v1096, %v1098
      %v1159 = vadd.f32 %v1158, %v1100
      %v1160 = vadd.f32 %v1159, %v1102
      %v1161 = vrot.slane %v1160, 4
      %v1162 = vadd.f32 %v1160, %v1161
      %v1163 = vrot.slane %v1162, 2
      %v1164 = vadd.f32 %v1162, %v1163
      %v1165 = vrot.slane %v1164, 1
      %v1166 = vadd.f32 %v1164, %v1165
      %v1167 = vadd.f32 %v1097, %v1099
      %v1168 = vadd.f32 %v1167, %v1101
      %v1169 = vadd.f32 %v1168, %v1103
      %v1170 = vrot.slane %v1169, 4
      %v1171 = vadd.f32 %v1169, %v1170
      %v1172 = vrot.slane %v1171, 2
      %v1173 = vadd.f32 %v1171, %v1172
      %v1174 = vrot.slane %v1173, 1
      %v1175 = vadd.f32 %v1173, %v1174
      %v1176 = vmax.f32 %v1112, %v1148
      %v1177 = vmax.f32 %v1130, %v1166
      %v1178 = vmax.f32 %v1176, %v1177
      %v1179 = vmax.f32 %v1121, %v1157
      %v1180 = vmax.f32 %v1139, %v1175
      %v1181 = vmax.f32 %v1179, %v1180
      %v1182 = vsub.f32 %v1112, %v1178
      %v1183 = vsub.f32 %v1121, %v1181
      %v1184 = vsub.f32 %v1130, %v1178
      %v1185 = vsub.f32 %v1139, %v1181
      %v1186 = vsub.f32 %v1148, %v1178
      %v1187 = vsub.f32 %v1157, %v1181
      %v1188 = vsub.f32 %v1166, %v1178
      %v1189 = vsub.f32 %v1175, %v1181
      %v1190 = vmul.f32 %v1182, 1.442695
      %v1191 = vpow.pop %v1190
      %v1192 = vmul.f32 %v1183, 1.442695
      %v1193 = vpow.pop %v1192
      %v1194 = vmul.f32 %v1184, 1.442695
      %v1195 = vpow.pop %v1194
      %v1196 = vmul.f32 %v1185, 1.442695
      %v1197 = vpow.pop %v1196
      %v1198 = vmul.f32 %v1186, 1.442695
      %v1199 = vpow.pop %v1198
      %v1200 = vmul.f32 %v1187, 1.442695
      %v1201 = vpow.pop %v1200
      %v1202 = vmul.f32 %v1188, 1.442695
      %v1203 = vpow.pop %v1202
      %v1204 = vmul.f32 %v1189, 1.442695
      %v1205 = vpow.pop %v1204
      %v1214 = vrot.slane %v1195, 7
      %vm1215 = vcmask 1041409
      %v1216 = vsel %vm1215, %v1214, %v1191
      %v1217 = vrot.slane %v1199, 6
      %vm1218 = vcmask 1042434
      %v1219 = vsel %vm1218, %v1217, %v1216
      %v1220 = vrot.slane %v1203, 5
      %vm1221 = vcmask 1043459
      %v1222 = vsel %vm1221, %v1220, %v1219
      %v1223 = vrot.slane %v1197, 7
      %v1224 = vsel %vm1215, %v1223, %v1193
      %v1225 = vrot.slane %v1201, 6
      %v1226 = vsel %vm1218, %v1225, %v1224
      %v1227 = vrot.slane %v1205, 5
      %v1228 = vsel %vm1221, %v1227, %v1226
      %vm1231 = vcmask 1043456
      %v1232 = vsel %vm1231, %v1222, 0.0
      %v1233 = vrot.slane %v1232, 4
      %v1234 = vadd.f32 %v1232, %v1233
      %v1235 = vrot.slane %v1234, 2
      %v1236 = vadd.f32 %v1234, %v1235
      %v1237 = vrot.slane %v1236, 1
      %v1238 = vadd.f32 %v1236, %v1237
      %v1239 = vsel %vm1231, %v1228, 0.0
      %v1240 = vrot.slane %v1239, 4
      %v1241 = vadd.f32 %v1239, %v1240
      %v1242 = vrot.slane %v1241, 2
      %v1243 = vadd.f32 %v1241, %v1242
      %v1244 = vrot.slane %v1243, 1
      %v1245 = vadd.f32 %v1243, %v1244
      %v1246 = vrcp.pop %v1238
      %v1247 = vmul.f32 %v1238, %v1246
      %v1248 = vsub.f32 1.0, %v1247
      %v1249 = vmul.f32 %v1246, %v1248
      %v1250 = vadd.f32 %v1246, %v1249
      %vm1251 = vweird.f32 %v1238
      %vm1252 = vweird.f32 %v1246
      %vm1253 = vmor %vm1251, %vm1252
      %v1254 = vsel %vm1253, %v1246, %v1250
      %v1255 = vand.u32 2147483647, %v1238
      %vm1256 = vcmp.eq.f32.partialorder %v1255, 8.507059e+37
      %v1257 = vand.u32 %v1238, 2147483648
      %v1258 = vor.u32 1.1754944e-38, %v1257
      %v1259 = vsel %vm1256, %v1258, %v1254
      %v1260 = vmul.f32 1.0, %v1259
      %v1261 = vrcp.pop %v1245
      %v1262 = vmul.f32 %v1245, %v1261
      %v1263 = vsub.f32 1.0, %v1262
      %v1264 = vmul.f32 %v1261, %v1263
      %v1265 = vadd.f32 %v1261, %v1264
      %vm1266 = vweird.f32 %v1245
      %vm1267 = vweird.f32 %v1261
      %vm1268 = vmor %vm1266, %vm1267
      %v1269 = vsel %vm1268, %v1261, %v1265
      %v1270 = vand.u32 2147483647, %v1245
      %vm1271 = vcmp.eq.f32.partialorder %v1270, 8.507059e+37
      %v1272 = vand.u32 %v1245, 2147483648
      %v1273 = vor.u32 1.1754944e-38, %v1272
      %v1274 = vsel %vm1271, %v1273, %v1269
      %v1275 = vmul.f32 1.0, %v1274
      %v1276 = vperm.slane %v1260, 0
      %v1277 = vperm.slane %v1275, 0
      %v1278 = vmul.f32 %v1191, %v1276
      %v1279 = vmul.f32 %v1193, %v1277
      %v1280 = vmul.f32 %v1195, %v1276
      %v1281 = vmul.f32 %v1197, %v1277
      %v1282 = vmul.f32 %v1199, %v1276
      %v1283 = vmul.f32 %v1201, %v1277
      %v1284 = vmul.f32 %v1203, %v1276
      %v1285 = vmul.f32 %v1205, %v1277
      %v1286 = vperm.slane %v1278, 0
      %v1287 = vperm.slane %v1279, 0
      %v1288 = vperm.slane %v1280, 0
      %v1289 = vperm.slane %v1281, 0
      %v1290 = vperm.slane %v1282, 0
      %v1291 = vperm.slane %v1283, 0
      %v1292 = vperm.slane %v1284, 0
      %v1293 = vperm.slane %v1285, 0
      %v1294 = vmul.f32 %v1286, %v904
      %v1295 = vmul.f32 %v1287, %v1033
      %v1296 = vmul.f32 %v1286, %v906
      %v1297 = vmul.f32 %v1287, %v1035
      %v1298 = vmul.f32 %v1286, %v909
      %v1299 = vmul.f32 %v1287, %v1038
      %v1300 = vmul.f32 %v1286, %v911
      %v1301 = vmul.f32 %v1287, %v1040
      %v1302 = vmul.f32 %v1288, %v904
      %v1303 = vmul.f32 %v1289, %v1033
      %v1304 = vmul.f32 %v1288, %v906
      %v1305 = vmul.f32 %v1289, %v1035
      %v1306 = vmul.f32 %v1288, %v909
      %v1307 = vmul.f32 %v1289, %v1038
      %v1308 = vmul.f32 %v1288, %v911
      %v1309 = vmul.f32 %v1289, %v1040
      %v1310 = vmul.f32 %v1290, %v904
      %v1311 = vmul.f32 %v1291, %v1033
      %v1312 = vmul.f32 %v1290, %v906
      %v1313 = vmul.f32 %v1291, %v1035
      %v1314 = vmul.f32 %v1290, %v909
      %v1315 = vmul.f32 %v1291, %v1038
      %v1316 = vmul.f32 %v1290, %v911
      %v1317 = vmul.f32 %v1291, %v1040
      %v1318 = vmul.f32 %v1292, %v904
      %v1319 = vmul.f32 %v1293, %v1033
      %v1320 = vmul.f32 %v1292, %v906
      %v1321 = vmul.f32 %v1293, %v1035
      %v1322 = vmul.f32 %v1292, %v909
      %v1323 = vmul.f32 %v1293, %v1038
      %v1324 = vmul.f32 %v1292, %v911
      %v1325 = vmul.f32 %v1293, %v1040
      %v1326 = vmul.f32 %v824, %v874
      %v1327 = vmul.f32 %v953, %v1003
      %v1328 = vmul.f32 %v826, %v876
      %v1329 = vmul.f32 %v955, %v1005
      %v1330 = vmul.f32 %v829, %v879
      %v1331 = vmul.f32 %v958, %v1008
      %v1332 = vmul.f32 %v831, %v881
      %v1333 = vmul.f32 %v960, %v1010
      %v1334 = vmul.f32 %v834, %v874
      %v1335 = vmul.f32 %v963, %v1003
      %v1336 = vmul.f32 %v836, %v876
      %v1337 = vmul.f32 %v965, %v1005
      %v1338 = vmul.f32 %v839, %v879
      %v1339 = vmul.f32 %v968, %v1008
      %v1340 = vmul.f32 %v841, %v881
      %v1341 = vmul.f32 %v970, %v1010
      %v1342 = vmul.f32 %v844, %v874
      %v1343 = vmul.f32 %v973, %v1003
      %v1344 = vmul.f32 %v846, %v876
      %v1345 = vmul.f32 %v975, %v1005
      %v1346 = vmul.f32 %v849, %v879
      %v1347 = vmul.f32 %v978, %v1008
      %v1348 = vmul.f32 %v851, %v881
      %v1349 = vmul.f32 %v980, %v1010
      %v1350 = vmul.f32 %v854, %v874
      %v1351 = vmul.f32 %v983, %v1003
      %v1352 = vmul.f32 %v856, %v876
      %v1353 = vmul.f32 %v985, %v1005
      %v1354 = vmul.f32 %v859, %v879
      %v1355 = vmul.f32 %v988, %v1008
      %v1356 = vmul.f32 %v861, %v881
      %v1357 = vmul.f32 %v990, %v1010
      %v1358 = vadd.f32 %v1326, %v1328
      %v1359 = vadd.f32 %v1358, %v1330
      %v1360 = vadd.f32 %v1359, %v1332
      %v1361 = vrot.slane %v1360, 4
      %v1362 = vadd.f32 %v1360, %v1361
      %v1363 = vrot.slane %v1362, 2
      %v1364 = vadd.f32 %v1362, %v1363
      %v1365 = vrot.slane %v1364, 1
      %v1366 = vadd.f32 %v1364, %v1365
      %v1367 = vadd.f32 %v1327, %v1329
      %v1368 = vadd.f32 %v1367, %v1331
      %v1369 = vadd.f32 %v1368, %v1333
      %v1370 = vrot.slane %v1369, 4
      %v1371 = vadd.f32 %v1369, %v1370
      %v1372 = vrot.slane %v1371, 2
      %v1373 = vadd.f32 %v1371, %v1372
      %v1374 = vrot.slane %v1373, 1
      %v1375 = vadd.f32 %v1373, %v1374
      %v1376 = vadd.f32 %v1334, %v1336
      %v1377 = vadd.f32 %v1376, %v1338
      %v1378 = vadd.f32 %v1377, %v1340
      %v1379 = vrot.slane %v1378, 4
      %v1380 = vadd.f32 %v1378, %v1379
      %v1381 = vrot.slane %v1380, 2
      %v1382 = vadd.f32 %v1380, %v1381
      %v1383 = vrot.slane %v1382, 1
      %v1384 = vadd.f32 %v1382, %v1383
      %v1385 = vadd.f32 %v1335, %v1337
      %v1386 = vadd.f32 %v1385, %v1339
      %v1387 = vadd.f32 %v1386, %v1341
      %v1388 = vrot.slane %v1387, 4
      %v1389 = vadd.f32 %v1387, %v1388
      %v1390 = vrot.slane %v1389, 2
      %v1391 = vadd.f32 %v1389, %v1390
      %v1392 = vrot.slane %v1391, 1
      %v1393 = vadd.f32 %v1391, %v1392
      %v1394 = vadd.f32 %v1342, %v1344
      %v1395 = vadd.f32 %v1394, %v1346
      %v1396 = vadd.f32 %v1395, %v1348
      %v1397 = vrot.slane %v1396, 4
      %v1398 = vadd.f32 %v1396, %v1397
      %v1399 = vrot.slane %v1398, 2
      %v1400 = vadd.f32 %v1398, %v1399
      %v1401 = vrot.slane %v1400, 1
      %v1402 = vadd.f32 %v1400, %v1401
      %v1403 = vadd.f32 %v1343, %v1345
      %v1404 = vadd.f32 %v1403, %v1347
      %v1405 = vadd.f32 %v1404, %v1349
      %v1406 = vrot.slane %v1405, 4
      %v1407 = vadd.f32 %v1405, %v1406
      %v1408 = vrot.slane %v1407, 2
      %v1409 = vadd.f32 %v1407, %v1408
      %v1410 = vrot.slane %v1409, 1
      %v1411 = vadd.f32 %v1409, %v1410
      %v1412 = vadd.f32 %v1350, %v1352
      %v1413 = vadd.f32 %v1412, %v1354
      %v1414 = vadd.f32 %v1413, %v1356
      %v1415 = vrot.slane %v1414, 4
      %v1416 = vadd.f32 %v1414, %v1415
      %v1417 = vrot.slane %v1416, 2
      %v1418 = vadd.f32 %v1416, %v1417
      %v1419 = vrot.slane %v1418, 1
      %v1420 = vadd.f32 %v1418, %v1419
      %v1421 = vadd.f32 %v1351, %v1353
      %v1422 = vadd.f32 %v1421, %v1355
      %v1423 = vadd.f32 %v1422, %v1357
      %v1424 = vrot.slane %v1423, 4
      %v1425 = vadd.f32 %v1423, %v1424
      %v1426 = vrot.slane %v1425, 2
      %v1427 = vadd.f32 %v1425, %v1426
      %v1428 = vrot.slane %v1427, 1
      %v1429 = vadd.f32 %v1427, %v1428
      %v1430 = vmax.f32 %v1366, %v1402
      %v1431 = vmax.f32 %v1384, %v1420
      %v1432 = vmax.f32 %v1430, %v1431
      %v1433 = vmax.f32 %v1375, %v1411
      %v1434 = vmax.f32 %v1393, %v1429
      %v1435 = vmax.f32 %v1433, %v1434
      %v1436 = vsub.f32 %v1366, %v1432
      %v1437 = vsub.f32 %v1375, %v1435
      %v1438 = vsub.f32 %v1384, %v1432
      %v1439 = vsub.f32 %v1393, %v1435
      %v1440 = vsub.f32 %v1402, %v1432
      %v1441 = vsub.f32 %v1411, %v1435
      %v1442 = vsub.f32 %v1420, %v1432
      %v1443 = vsub.f32 %v1429, %v1435
      %v1444 = vmul.f32 %v1436, 1.442695
      %v1445 = vpow.pop %v1444
      %v1446 = vmul.f32 %v1437, 1.442695
      %v1447 = vpow.pop %v1446
      %v1448 = vmul.f32 %v1438, 1.442695
      %v1449 = vpow.pop %v1448
      %v1450 = vmul.f32 %v1439, 1.442695
      %v1451 = vpow.pop %v1450
      %v1452 = vmul.f32 %v1440, 1.442695
      %v1453 = vpow.pop %v1452
      %v1454 = vmul.f32 %v1441, 1.442695
      %v1455 = vpow.pop %v1454
      %v1456 = vmul.f32 %v1442, 1.442695
      %v1457 = vpow.pop %v1456
      %v1458 = vmul.f32 %v1443, 1.442695
      %v1459 = vpow.pop %v1458
      %v1468 = vrot.slane %v1449, 7
      %v1469 = vsel %vm1215, %v1468, %v1445
      %v1470 = vrot.slane %v1453, 6
      %v1471 = vsel %vm1218, %v1470, %v1469
      %v1472 = vrot.slane %v1457, 5
      %v1473 = vsel %vm1221, %v1472, %v1471
      %v1474 = vrot.slane %v1451, 7
      %v1475 = vsel %vm1215, %v1474, %v1447
      %v1476 = vrot.slane %v1455, 6
      %v1477 = vsel %vm1218, %v1476, %v1475
      %v1478 = vrot.slane %v1459, 5
      %v1479 = vsel %vm1221, %v1478, %v1477
      %v1482 = vsel %vm1231, %v1473, 0.0
      %v1483 = vrot.slane %v1482, 4
      %v1484 = vadd.f32 %v1482, %v1483
      %v1485 = vrot.slane %v1484, 2
      %v1486 = vadd.f32 %v1484, %v1485
      %v1487 = vrot.slane %v1486, 1
      %v1488 = vadd.f32 %v1486, %v1487
      %v1489 = vsel %vm1231, %v1479, 0.0
      %v1490 = vrot.slane %v1489, 4
      %v1491 = vadd.f32 %v1489, %v1490
      %v1492 = vrot.slane %v1491, 2
      %v1493 = vadd.f32 %v1491, %v1492
      %v1494 = vrot.slane %v1493, 1
      %v1495 = vadd.f32 %v1493, %v1494
      %v1496 = vrcp.pop %v1488
      %v1497 = vmul.f32 %v1488, %v1496
      %v1498 = vsub.f32 1.0, %v1497
      %v1499 = vmul.f32 %v1496, %v1498
      %v1500 = vadd.f32 %v1496, %v1499
      %vm1501 = vweird.f32 %v1488
      %vm1502 = vweird.f32 %v1496
      %vm1503 = vmor %vm1501, %vm1502
      %v1504 = vsel %vm1503, %v1496, %v1500
      %v1505 = vand.u32 2147483647, %v1488
      %vm1506 = vcmp.eq.f32.partialorder %v1505, 8.507059e+37
      %v1507 = vand.u32 %v1488, 2147483648
      %v1508 = vor.u32 1.1754944e-38, %v1507
      %v1509 = vsel %vm1506, %v1508, %v1504
      %v1510 = vmul.f32 1.0, %v1509
      %v1511 = vrcp.pop %v1495
      %v1512 = vmul.f32 %v1495, %v1511
      %v1513 = vsub.f32 1.0, %v1512
      %v1514 = vmul.f32 %v1511, %v1513
      %v1515 = vadd.f32 %v1511, %v1514
      %vm1516 = vweird.f32 %v1495
      %vm1517 = vweird.f32 %v1511
      %vm1518 = vmor %vm1516, %vm1517
      %v1519 = vsel %vm1518, %v1511, %v1515
      %v1520 = vand.u32 2147483647, %v1495
      %vm1521 = vcmp.eq.f32.partialorder %v1520, 8.507059e+37
      %v1522 = vand.u32 %v1495, 2147483648
      %v1523 = vor.u32 1.1754944e-38, %v1522
      %v1524 = vsel %vm1521, %v1523, %v1519
      %v1525 = vmul.f32 1.0, %v1524
      %v1526 = vperm.slane %v1510, 0
      %v1527 = vperm.slane %v1525, 0
      %v1528 = vmul.f32 %v1445, %v1526
      %v1529 = vmul.f32 %v1447, %v1527
      %v1530 = vmul.f32 %v1449, %v1526
      %v1531 = vmul.f32 %v1451, %v1527
      %v1532 = vmul.f32 %v1453, %v1526
      %v1533 = vmul.f32 %v1455, %v1527
      %v1534 = vmul.f32 %v1457, %v1526
      %v1535 = vmul.f32 %v1459, %v1527
      %v1536 = vperm.slane %v1528, 0
      %v1537 = vperm.slane %v1529, 0
      %v1538 = vperm.slane %v1530, 0
      %v1539 = vperm.slane %v1531, 0
      %v1540 = vperm.slane %v1532, 0
      %v1541 = vperm.slane %v1533, 0
      %v1542 = vperm.slane %v1534, 0
      %v1543 = vperm.slane %v1535, 0
      %v1544 = vmul.f32 %v1536, %v914
      %v1545 = vmul.f32 %v1537, %v1043
      %v1546 = vmul.f32 %v1536, %v916
      %v1547 = vmul.f32 %v1537, %v1045
      %v1548 = vmul.f32 %v1536, %v919
      %v1549 = vmul.f32 %v1537, %v1048
      %v1550 = vmul.f32 %v1536, %v921
      %v1551 = vmul.f32 %v1537, %v1050
      %v1552 = vmul.f32 %v1538, %v914
      %v1553 = vmul.f32 %v1539, %v1043
      %v1554 = vmul.f32 %v1538, %v916
      %v1555 = vmul.f32 %v1539, %v1045
      %v1556 = vmul.f32 %v1538, %v919
      %v1557 = vmul.f32 %v1539, %v1048
      %v1558 = vmul.f32 %v1538, %v921
      %v1559 = vmul.f32 %v1539, %v1050
      %v1560 = vmul.f32 %v1540, %v914
      %v1561 = vmul.f32 %v1541, %v1043
      %v1562 = vmul.f32 %v1540, %v916
      %v1563 = vmul.f32 %v1541, %v1045
      %v1564 = vmul.f32 %v1540, %v919
      %v1565 = vmul.f32 %v1541, %v1048
      %v1566 = vmul.f32 %v1540, %v921
      %v1567 = vmul.f32 %v1541, %v1050
      %v1568 = vmul.f32 %v1542, %v914
      %v1569 = vmul.f32 %v1543, %v1043
      %v1570 = vmul.f32 %v1542, %v916
      %v1571 = vmul.f32 %v1543, %v1045
      %v1572 = vmul.f32 %v1542, %v919
      %v1573 = vmul.f32 %v1543, %v1048
      %v1574 = vmul.f32 %v1542, %v921
      %v1575 = vmul.f32 %v1543, %v1050
      %v1576 = vadd.f32 %v1294, %v1544
      %v1577 = vadd.f32 %v1295, %v1545
      %v1578 = vadd.f32 %v1296, %v1546
      %v1579 = vadd.f32 %v1297, %v1547
      %v1580 = vadd.f32 %v1298, %v1548
      %v1581 = vadd.f32 %v1299, %v1549
      %v1582 = vadd.f32 %v1300, %v1550
      %v1583 = vadd.f32 %v1301, %v1551
      %v1584 = vadd.f32 %v1302, %v1552
      %v1585 = vadd.f32 %v1303, %v1553
      %v1586 = vadd.f32 %v1304, %v1554
      %v1587 = vadd.f32 %v1305, %v1555
      %v1588 = vadd.f32 %v1306, %v1556
      %v1589 = vadd.f32 %v1307, %v1557
      %v1590 = vadd.f32 %v1308, %v1558
      %v1591 = vadd.f32 %v1309, %v1559
      %v1592 = vadd.f32 %v1310, %v1560
      %v1593 = vadd.f32 %v1311, %v1561
      %v1594 = vadd.f32 %v1312, %v1562
      %v1595 = vadd.f32 %v1313, %v1563
      %v1596 = vadd.f32 %v1314, %v1564
      %v1597 = vadd.f32 %v1315, %v1565
      %v1598 = vadd.f32 %v1316, %v1566
      %v1599 = vadd.f32 %v1317, %v1567
      %v1600 = vadd.f32 %v1318, %v1568
      %v1601 = vadd.f32 %v1319, %v1569
      %v1602 = vadd.f32 %v1320, %v1570
      %v1603 = vadd.f32 %v1321, %v1571
      %v1604 = vadd.f32 %v1322, %v1572
      %v1605 = vadd.f32 %v1323, %v1573
      %v1606 = vadd.f32 %v1324, %v1574
      %v1607 = vadd.f32 %v1325, %v1575
      %v1608 = vmul.f32 %v824, %v884
      %v1609 = vmul.f32 %v953, %v1013
      %v1610 = vmul.f32 %v826, %v886
      %v1611 = vmul.f32 %v955, %v1015
      %v1612 = vmul.f32 %v829, %v889
      %v1613 = vmul.f32 %v958, %v1018
      %v1614 = vmul.f32 %v831, %v891
      %v1615 = vmul.f32 %v960, %v1020
      %v1616 = vmul.f32 %v834, %v884
      %v1617 = vmul.f32 %v963, %v1013
      %v1618 = vmul.f32 %v836, %v886
      %v1619 = vmul.f32 %v965, %v1015
      %v1620 = vmul.f32 %v839, %v889
      %v1621 = vmul.f32 %v968, %v1018
      %v1622 = vmul.f32 %v841, %v891
      %v1623 = vmul.f32 %v970, %v1020
      %v1624 = vmul.f32 %v844, %v884
      %v1625 = vmul.f32 %v973, %v1013
      %v1626 = vmul.f32 %v846, %v886
      %v1627 = vmul.f32 %v975, %v1015
      %v1628 = vmul.f32 %v849, %v889
      %v1629 = vmul.f32 %v978, %v1018
      %v1630 = vmul.f32 %v851, %v891
      %v1631 = vmul.f32 %v980, %v1020
      %v1632 = vmul.f32 %v854, %v884
      %v1633 = vmul.f32 %v983, %v1013
      %v1634 = vmul.f32 %v856, %v886
      %v1635 = vmul.f32 %v985, %v1015
      %v1636 = vmul.f32 %v859, %v889
      %v1637 = vmul.f32 %v988, %v1018
      %v1638 = vmul.f32 %v861, %v891
      %v1639 = vmul.f32 %v990, %v1020
      %v1640 = vadd.f32 %v1608, %v1610
      %v1641 = vadd.f32 %v1640, %v1612
      %v1642 = vadd.f32 %v1641, %v1614
      %v1643 = vrot.slane %v1642, 4
      %v1644 = vadd.f32 %v1642, %v1643
      %v1645 = vrot.slane %v1644, 2
      %v1646 = vadd.f32 %v1644, %v1645
      %v1647 = vrot.slane %v1646, 1
      %v1648 = vadd.f32 %v1646, %v1647
      %v1649 = vadd.f32 %v1609, %v1611
      %v1650 = vadd.f32 %v1649, %v1613
      %v1651 = vadd.f32 %v1650, %v1615
      %v1652 = vrot.slane %v1651, 4
      %v1653 = vadd.f32 %v1651, %v1652
      %v1654 = vrot.slane %v1653, 2
      %v1655 = vadd.f32 %v1653, %v1654
      %v1656 = vrot.slane %v1655, 1
      %v1657 = vadd.f32 %v1655, %v1656
      %v1658 = vadd.f32 %v1616, %v1618
      %v1659 = vadd.f32 %v1658, %v1620
      %v1660 = vadd.f32 %v1659, %v1622
      %v1661 = vrot.slane %v1660, 4
      %v1662 = vadd.f32 %v1660, %v1661
      %v1663 = vrot.slane %v1662, 2
      %v1664 = vadd.f32 %v1662, %v1663
      %v1665 = vrot.slane %v1664, 1
      %v1666 = vadd.f32 %v1664, %v1665
      %v1667 = vadd.f32 %v1617, %v1619
      %v1668 = vadd.f32 %v1667, %v1621
      %v1669 = vadd.f32 %v1668, %v1623
      %v1670 = vrot.slane %v1669, 4
      %v1671 = vadd.f32 %v1669, %v1670
      %v1672 = vrot.slane %v1671, 2
      %v1673 = vadd.f32 %v1671, %v1672
      %v1674 = vrot.slane %v1673, 1
      %v1675 = vadd.f32 %v1673, %v1674
      %v1676 = vadd.f32 %v1624, %v1626
      %v1677 = vadd.f32 %v1676, %v1628
      %v1678 = vadd.f32 %v1677, %v1630
      %v1679 = vrot.slane %v1678, 4
      %v1680 = vadd.f32 %v1678, %v1679
      %v1681 = vrot.slane %v1680, 2
      %v1682 = vadd.f32 %v1680, %v1681
      %v1683 = vrot.slane %v1682, 1
      %v1684 = vadd.f32 %v1682, %v1683
      %v1685 = vadd.f32 %v1625, %v1627
      %v1686 = vadd.f32 %v1685, %v1629
      %v1687 = vadd.f32 %v1686, %v1631
      %v1688 = vrot.slane %v1687, 4
      %v1689 = vadd.f32 %v1687, %v1688
      %v1690 = vrot.slane %v1689, 2
      %v1691 = vadd.f32 %v1689, %v1690
      %v1692 = vrot.slane %v1691, 1
      %v1693 = vadd.f32 %v1691, %v1692
      %v1694 = vadd.f32 %v1632, %v1634
      %v1695 = vadd.f32 %v1694, %v1636
      %v1696 = vadd.f32 %v1695, %v1638
      %v1697 = vrot.slane %v1696, 4
      %v1698 = vadd.f32 %v1696, %v1697
      %v1699 = vrot.slane %v1698, 2
      %v1700 = vadd.f32 %v1698, %v1699
      %v1701 = vrot.slane %v1700, 1
      %v1702 = vadd.f32 %v1700, %v1701
      %v1703 = vadd.f32 %v1633, %v1635
      %v1704 = vadd.f32 %v1703, %v1637
      %v1705 = vadd.f32 %v1704, %v1639
      %v1706 = vrot.slane %v1705, 4
      %v1707 = vadd.f32 %v1705, %v1706
      %v1708 = vrot.slane %v1707, 2
      %v1709 = vadd.f32 %v1707, %v1708
      %v1710 = vrot.slane %v1709, 1
      %v1711 = vadd.f32 %v1709, %v1710
      %v1712 = vmax.f32 %v1648, %v1684
      %v1713 = vmax.f32 %v1666, %v1702
      %v1714 = vmax.f32 %v1712, %v1713
      %v1715 = vmax.f32 %v1657, %v1693
      %v1716 = vmax.f32 %v1675, %v1711
      %v1717 = vmax.f32 %v1715, %v1716
      %v1718 = vsub.f32 %v1648, %v1714
      %v1719 = vsub.f32 %v1657, %v1717
      %v1720 = vsub.f32 %v1666, %v1714
      %v1721 = vsub.f32 %v1675, %v1717
      %v1722 = vsub.f32 %v1684, %v1714
      %v1723 = vsub.f32 %v1693, %v1717
      %v1724 = vsub.f32 %v1702, %v1714
      %v1725 = vsub.f32 %v1711, %v1717
      %v1726 = vmul.f32 %v1718, 1.442695
      %v1727 = vpow.pop %v1726
      %v1728 = vmul.f32 %v1719, 1.442695
      %v1729 = vpow.pop %v1728
      %v1730 = vmul.f32 %v1720, 1.442695
      %v1731 = vpow.pop %v1730
      %v1732 = vmul.f32 %v1721, 1.442695
      %v1733 = vpow.pop %v1732
      %v1734 = vmul.f32 %v1722, 1.442695
      %v1735 = vpow.pop %v1734
      %v1736 = vmul.f32 %v1723, 1.442695
      %v1737 = vpow.pop %v1736
      %v1738 = vmul.f32 %v1724, 1.442695
      %v1739 = vpow.pop %v1738
      %v1740 = vmul.f32 %v1725, 1.442695
      %v1741 = vpow.pop %v1740
      %v1750 = vrot.slane %v1731, 7
      %v1751 = vsel %vm1215, %v1750, %v1727
      %v1752 = vrot.slane %v1735, 6
      %v1753 = vsel %vm1218, %v1752, %v1751
      %v1754 = vrot.slane %v1739, 5
      %v1755 = vsel %vm1221, %v1754, %v1753
      %v1756 = vrot.slane %v1733, 7
      %v1757 = vsel %vm1215, %v1756, %v1729
      %v1758 = vrot.slane %v1737, 6
      %v1759 = vsel %vm1218, %v1758, %v1757
      %v1760 = vrot.slane %v1741, 5
      %v1761 = vsel %vm1221, %v1760, %v1759
      %v1764 = vsel %vm1231, %v1755, 0.0
      %v1765 = vrot.slane %v1764, 4
      %v1766 = vadd.f32 %v1764, %v1765
      %v1767 = vrot.slane %v1766, 2
      %v1768 = vadd.f32 %v1766, %v1767
      %v1769 = vrot.slane %v1768, 1
      %v1770 = vadd.f32 %v1768, %v1769
      %v1771 = vsel %vm1231, %v1761, 0.0
      %v1772 = vrot.slane %v1771, 4
      %v1773 = vadd.f32 %v1771, %v1772
      %v1774 = vrot.slane %v1773, 2
      %v1775 = vadd.f32 %v1773, %v1774
      %v1776 = vrot.slane %v1775, 1
      %v1777 = vadd.f32 %v1775, %v1776
      %v1778 = vrcp.pop %v1770
      %v1779 = vmul.f32 %v1770, %v1778
      %v1780 = vsub.f32 1.0, %v1779
      %v1781 = vmul.f32 %v1778, %v1780
      %v1782 = vadd.f32 %v1778, %v1781
      %vm1783 = vweird.f32 %v1770
      %vm1784 = vweird.f32 %v1778
      %vm1785 = vmor %vm1783, %vm1784
      %v1786 = vsel %vm1785, %v1778, %v1782
      %v1787 = vand.u32 2147483647, %v1770
      %vm1788 = vcmp.eq.f32.partialorder %v1787, 8.507059e+37
      %v1789 = vand.u32 %v1770, 2147483648
      %v1790 = vor.u32 1.1754944e-38, %v1789
      %v1791 = vsel %vm1788, %v1790, %v1786
      %v1792 = vmul.f32 1.0, %v1791
      %v1793 = vrcp.pop %v1777
      %v1794 = vmul.f32 %v1777, %v1793
      %v1795 = vsub.f32 1.0, %v1794
      %v1796 = vmul.f32 %v1793, %v1795
      %v1797 = vadd.f32 %v1793, %v1796
      %vm1798 = vweird.f32 %v1777
      %vm1799 = vweird.f32 %v1793
      %vm1800 = vmor %vm1798, %vm1799
      %v1801 = vsel %vm1800, %v1793, %v1797
      %v1802 = vand.u32 2147483647, %v1777
      %vm1803 = vcmp.eq.f32.partialorder %v1802, 8.507059e+37
      %v1804 = vand.u32 %v1777, 2147483648
      %v1805 = vor.u32 1.1754944e-38, %v1804
      %v1806 = vsel %vm1803, %v1805, %v1801
      %v1807 = vmul.f32 1.0, %v1806
      %v1808 = vperm.slane %v1792, 0
      %v1809 = vperm.slane %v1807, 0
      %v1810 = vmul.f32 %v1727, %v1808
      %v1811 = vmul.f32 %v1729, %v1809
      %v1812 = vmul.f32 %v1731, %v1808
      %v1813 = vmul.f32 %v1733, %v1809
      %v1814 = vmul.f32 %v1735, %v1808
      %v1815 = vmul.f32 %v1737, %v1809
      %v1816 = vmul.f32 %v1739, %v1808
      %v1817 = vmul.f32 %v1741, %v1809
      %v1818 = vperm.slane %v1810, 0
      %v1819 = vperm.slane %v1811, 0
      %v1820 = vperm.slane %v1812, 0
      %v1821 = vperm.slane %v1813, 0
      %v1822 = vperm.slane %v1814, 0
      %v1823 = vperm.slane %v1815, 0
      %v1824 = vperm.slane %v1816, 0
      %v1825 = vperm.slane %v1817, 0
      %v1826 = vmul.f32 %v1818, %v924
      %v1827 = vmul.f32 %v1819, %v1053
      %v1828 = vmul.f32 %v1818, %v926
      %v1829 = vmul.f32 %v1819, %v1055
      %v1830 = vmul.f32 %v1818, %v929
      %v1831 = vmul.f32 %v1819, %v1058
      %v1832 = vmul.f32 %v1818, %v931
      %v1833 = vmul.f32 %v1819, %v1060
      %v1834 = vmul.f32 %v1820, %v924
      %v1835 = vmul.f32 %v1821, %v1053
      %v1836 = vmul.f32 %v1820, %v926
      %v1837 = vmul.f32 %v1821, %v1055
      %v1838 = vmul.f32 %v1820, %v929
      %v1839 = vmul.f32 %v1821, %v1058
      %v1840 = vmul.f32 %v1820, %v931
      %v1841 = vmul.f32 %v1821, %v1060
      %v1842 = vmul.f32 %v1822, %v924
      %v1843 = vmul.f32 %v1823, %v1053
      %v1844 = vmul.f32 %v1822, %v926
      %v1845 = vmul.f32 %v1823, %v1055
      %v1846 = vmul.f32 %v1822, %v929
      %v1847 = vmul.f32 %v1823, %v1058
      %v1848 = vmul.f32 %v1822, %v931
      %v1849 = vmul.f32 %v1823, %v1060
      %v1850 = vmul.f32 %v1824, %v924
      %v1851 = vmul.f32 %v1825, %v1053
      %v1852 = vmul.f32 %v1824, %v926
      %v1853 = vmul.f32 %v1825, %v1055
      %v1854 = vmul.f32 %v1824, %v929
      %v1855 = vmul.f32 %v1825, %v1058
      %v1856 = vmul.f32 %v1824, %v931
      %v1857 = vmul.f32 %v1825, %v1060
      %v1858 = vadd.f32 %v1576, %v1826
      %v1859 = vadd.f32 %v1577, %v1827
      %v1860 = vadd.f32 %v1578, %v1828
      %v1861 = vadd.f32 %v1579, %v1829
      %v1862 = vadd.f32 %v1580, %v1830
      %v1863 = vadd.f32 %v1581, %v1831
      %v1864 = vadd.f32 %v1582, %v1832
      %v1865 = vadd.f32 %v1583, %v1833
      %v1866 = vadd.f32 %v1584, %v1834
      %v1867 = vadd.f32 %v1585, %v1835
      %v1868 = vadd.f32 %v1586, %v1836
      %v1869 = vadd.f32 %v1587, %v1837
      %v1870 = vadd.f32 %v1588, %v1838
      %v1871 = vadd.f32 %v1589, %v1839
      %v1872 = vadd.f32 %v1590, %v1840
      %v1873 = vadd.f32 %v1591, %v1841
      %v1874 = vadd.f32 %v1592, %v1842
      %v1875 = vadd.f32 %v1593, %v1843
      %v1876 = vadd.f32 %v1594, %v1844
      %v1877 = vadd.f32 %v1595, %v1845
      %v1878 = vadd.f32 %v1596, %v1846
      %v1879 = vadd.f32 %v1597, %v1847
      %v1880 = vadd.f32 %v1598, %v1848
      %v1881 = vadd.f32 %v1599, %v1849
      %v1882 = vadd.f32 %v1600, %v1850
      %v1883 = vadd.f32 %v1601, %v1851
      %v1884 = vadd.f32 %v1602, %v1852
      %v1885 = vadd.f32 %v1603, %v1853
      %v1886 = vadd.f32 %v1604, %v1854
      %v1887 = vadd.f32 %v1605, %v1855
      %v1888 = vadd.f32 %v1606, %v1856
      %v1889 = vadd.f32 %v1607, %v1857
      %v1890 = vmul.f32 %v824, %v894
      %v1891 = vmul.f32 %v953, %v1023
      %v1892 = vmul.f32 %v826, %v896
      %v1893 = vmul.f32 %v955, %v1025
      %v1894 = vmul.f32 %v829, %v899
      %v1895 = vmul.f32 %v958, %v1028
      %v1896 = vmul.f32 %v831, %v901
      %v1897 = vmul.f32 %v960, %v1030
      %v1898 = vmul.f32 %v834, %v894
      %v1899 = vmul.f32 %v963, %v1023
      %v1900 = vmul.f32 %v836, %v896
      %v1901 = vmul.f32 %v965, %v1025
      %v1902 = vmul.f32 %v839, %v899
      %v1903 = vmul.f32 %v968, %v1028
      %v1904 = vmul.f32 %v841, %v901
      %v1905 = vmul.f32 %v970, %v1030
      %v1906 = vmul.f32 %v844, %v894
      %v1907 = vmul.f32 %v973, %v1023
      %v1908 = vmul.f32 %v846, %v896
      %v1909 = vmul.f32 %v975, %v1025
      %v1910 = vmul.f32 %v849, %v899
      %v1911 = vmul.f32 %v978, %v1028
      %v1912 = vmul.f32 %v851, %v901
      %v1913 = vmul.f32 %v980, %v1030
      %v1914 = vmul.f32 %v854, %v894
      %v1915 = vmul.f32 %v983, %v1023
      %v1916 = vmul.f32 %v856, %v896
      %v1917 = vmul.f32 %v985, %v1025
      %v1918 = vmul.f32 %v859, %v899
      %v1919 = vmul.f32 %v988, %v1028
      %v1920 = vmul.f32 %v861, %v901
      %v1921 = vmul.f32 %v990, %v1030
      %v1922 = vadd.f32 %v1890, %v1892
      %v1923 = vadd.f32 %v1922, %v1894
      %v1924 = vadd.f32 %v1923, %v1896
      %v1925 = vrot.slane %v1924, 4
      %v1926 = vadd.f32 %v1924, %v1925
      %v1927 = vrot.slane %v1926, 2
      %v1928 = vadd.f32 %v1926, %v1927
      %v1929 = vrot.slane %v1928, 1
      %v1930 = vadd.f32 %v1928, %v1929
      %v1931 = vadd.f32 %v1891, %v1893
      %v1932 = vadd.f32 %v1931, %v1895
      %v1933 = vadd.f32 %v1932, %v1897
      %v1934 = vrot.slane %v1933, 4
      %v1935 = vadd.f32 %v1933, %v1934
      %v1936 = vrot.slane %v1935, 2
      %v1937 = vadd.f32 %v1935, %v1936
      %v1938 = vrot.slane %v1937, 1
      %v1939 = vadd.f32 %v1937, %v1938
      %v1940 = vadd.f32 %v1898, %v1900
      %v1941 = vadd.f32 %v1940, %v1902
      %v1942 = vadd.f32 %v1941, %v1904
      %v1943 = vrot.slane %v1942, 4
      %v1944 = vadd.f32 %v1942, %v1943
      %v1945 = vrot.slane %v1944, 2
      %v1946 = vadd.f32 %v1944, %v1945
      %v1947 = vrot.slane %v1946, 1
      %v1948 = vadd.f32 %v1946, %v1947
      %v1949 = vadd.f32 %v1899, %v1901
      %v1950 = vadd.f32 %v1949, %v1903
      %v1951 = vadd.f32 %v1950, %v1905
      %v1952 = vrot.slane %v1951, 4
      %v1953 = vadd.f32 %v1951, %v1952
      %v1954 = vrot.slane %v1953, 2
      %v1955 = vadd.f32 %v1953, %v1954
      %v1956 = vrot.slane %v1955, 1
      %v1957 = vadd.f32 %v1955, %v1956
      %v1958 = vadd.f32 %v1906, %v1908
      %v1959 = vadd.f32 %v1958, %v1910
      %v1960 = vadd.f32 %v1959, %v1912
      %v1961 = vrot.slane %v1960, 4
      %v1962 = vadd.f32 %v1960, %v1961
      %v1963 = vrot.slane %v1962, 2
      %v1964 = vadd.f32 %v1962, %v1963
      %v1965 = vrot.slane %v1964, 1
      %v1966 = vadd.f32 %v1964, %v1965
      %v1967 = vadd.f32 %v1907, %v1909
      %v1968 = vadd.f32 %v1967, %v1911
      %v1969 = vadd.f32 %v1968, %v1913
      %v1970 = vrot.slane %v1969, 4
      %v1971 = vadd.f32 %v1969, %v1970
      %v1972 = vrot.slane %v1971, 2
      %v1973 = vadd.f32 %v1971, %v1972
      %v1974 = vrot.slane %v1973, 1
      %v1975 = vadd.f32 %v1973, %v1974
      %v1976 = vadd.f32 %v1914, %v1916
      %v1977 = vadd.f32 %v1976, %v1918
      %v1978 = vadd.f32 %v1977, %v1920
      %v1979 = vrot.slane %v1978, 4
      %v1980 = vadd.f32 %v1978, %v1979
      %v1981 = vrot.slane %v1980, 2
      %v1982 = vadd.f32 %v1980, %v1981
      %v1983 = vrot.slane %v1982, 1
      %v1984 = vadd.f32 %v1982, %v1983
      %v1985 = vadd.f32 %v1915, %v1917
      %v1986 = vadd.f32 %v1985, %v1919
      %v1987 = vadd.f32 %v1986, %v1921
      %v1988 = vrot.slane %v1987, 4
      %v1989 = vadd.f32 %v1987, %v1988
      %v1990 = vrot.slane %v1989, 2
      %v1991 = vadd.f32 %v1989, %v1990
      %v1992 = vrot.slane %v1991, 1
      %v1993 = vadd.f32 %v1991, %v1992
      %v1994 = vmax.f32 %v1930, %v1966
      %v1995 = vmax.f32 %v1948, %v1984
      %v1996 = vmax.f32 %v1994, %v1995
      %v1997 = vmax.f32 %v1939, %v1975
      %v1998 = vmax.f32 %v1957, %v1993
      %v1999 = vmax.f32 %v1997, %v1998
      %v2000 = vsub.f32 %v1930, %v1996
      %v2001 = vsub.f32 %v1939, %v1999
      %v2002 = vsub.f32 %v1948, %v1996
      %v2003 = vsub.f32 %v1957, %v1999
      %v2004 = vsub.f32 %v1966, %v1996
      %v2005 = vsub.f32 %v1975, %v1999
      %v2006 = vsub.f32 %v1984, %v1996
      %v2007 = vsub.f32 %v1993, %v1999
      %v2008 = vmul.f32 %v2000, 1.442695
      %v2009 = vpow.pop %v2008
      %v2010 = vmul.f32 %v2001, 1.442695
      %v2011 = vpow.pop %v2010
      %v2012 = vmul.f32 %v2002, 1.442695
      %v2013 = vpow.pop %v2012
      %v2014 = vmul.f32 %v2003, 1.442695
      %v2015 = vpow.pop %v2014
      %v2016 = vmul.f32 %v2004, 1.442695
      %v2017 = vpow.pop %v2016
      %v2018 = vmul.f32 %v2005, 1.442695
      %v2019 = vpow.pop %v2018
      %v2020 = vmul.f32 %v2006, 1.442695
      %v2021 = vpow.pop %v2020
      %v2022 = vmul.f32 %v2007, 1.442695
      %v2023 = vpow.pop %v2022
      %v2032 = vrot.slane %v2013, 7
      %v2033 = vsel %vm1215, %v2032, %v2009
      %v2034 = vrot.slane %v2017, 6
      %v2035 = vsel %vm1218, %v2034, %v2033
      %v2036 = vrot.slane %v2021, 5
      %v2037 = vsel %vm1221, %v2036, %v2035
      %v2038 = vrot.slane %v2015, 7
      %v2039 = vsel %vm1215, %v2038, %v2011
      %v2040 = vrot.slane %v2019, 6
      %v2041 = vsel %vm1218, %v2040, %v2039
      %v2042 = vrot.slane %v2023, 5
      %v2043 = vsel %vm1221, %v2042, %v2041
      %v2046 = vsel %vm1231, %v2037, 0.0
      %v2047 = vrot.slane %v2046, 4
      %v2048 = vadd.f32 %v2046, %v2047
      %v2049 = vrot.slane %v2048, 2
      %v2050 = vadd.f32 %v2048, %v2049
      %v2051 = vrot.slane %v2050, 1
      %v2052 = vadd.f32 %v2050, %v2051
      %v2053 = vsel %vm1231, %v2043, 0.0
      %v2054 = vrot.slane %v2053, 4
      %v2055 = vadd.f32 %v2053, %v2054
      %v2056 = vrot.slane %v2055, 2
      %v2057 = vadd.f32 %v2055, %v2056
      %v2058 = vrot.slane %v2057, 1
      %v2059 = vadd.f32 %v2057, %v2058
      %v2060 = vrcp.pop %v2052
      %v2061 = vmul.f32 %v2052, %v2060
      %v2062 = vsub.f32 1.0, %v2061
      %v2063 = vmul.f32 %v2060, %v2062
      %v2064 = vadd.f32 %v2060, %v2063
      %vm2065 = vweird.f32 %v2052
      %vm2066 = vweird.f32 %v2060
      %vm2067 = vmor %vm2065, %vm2066
      %v2068 = vsel %vm2067, %v2060, %v2064
      %v2069 = vand.u32 2147483647, %v2052
      %vm2070 = vcmp.eq.f32.partialorder %v2069, 8.507059e+37
      %v2071 = vand.u32 %v2052, 2147483648
      %v2072 = vor.u32 1.1754944e-38, %v2071
      %v2073 = vsel %vm2070, %v2072, %v2068
      %v2074 = vmul.f32 1.0, %v2073
      %v2075 = vrcp.pop %v2059
      %v2076 = vmul.f32 %v2059, %v2075
      %v2077 = vsub.f32 1.0, %v2076
      %v2078 = vmul.f32 %v2075, %v2077
      %v2079 = vadd.f32 %v2075, %v2078
      %vm2080 = vweird.f32 %v2059
      %vm2081 = vweird.f32 %v2075
      %vm2082 = vmor %vm2080, %vm2081
      %v2083 = vsel %vm2082, %v2075, %v2079
      %v2084 = vand.u32 2147483647, %v2059
      %vm2085 = vcmp.eq.f32.partialorder %v2084, 8.507059e+37
      %v2086 = vand.u32 %v2059, 2147483648
      %v2087 = vor.u32 1.1754944e-38, %v2086
      %v2088 = vsel %vm2085, %v2087, %v2083
      %v2089 = vmul.f32 1.0, %v2088
      %v2090 = vperm.slane %v2074, 0
      %v2091 = vperm.slane %v2089, 0
      %v2092 = vmul.f32 %v2009, %v2090
      %v2093 = vmul.f32 %v2011, %v2091
      %v2094 = vmul.f32 %v2013, %v2090
      %v2095 = vmul.f32 %v2015, %v2091
      %v2096 = vmul.f32 %v2017, %v2090
      %v2097 = vmul.f32 %v2019, %v2091
      %v2098 = vmul.f32 %v2021, %v2090
      %v2099 = vmul.f32 %v2023, %v2091
      %v2100 = vperm.slane %v2092, 0
      %v2101 = vperm.slane %v2093, 0
      %v2102 = vperm.slane %v2094, 0
      %v2103 = vperm.slane %v2095, 0
      %v2104 = vperm.slane %v2096, 0
      %v2105 = vperm.slane %v2097, 0
      %v2106 = vperm.slane %v2098, 0
      %v2107 = vperm.slane %v2099, 0
      %v2108 = vmul.f32 %v2100, %v934
      %v2109 = vmul.f32 %v2101, %v1063
      %v2110 = vmul.f32 %v2100, %v936
      %v2111 = vmul.f32 %v2101, %v1065
      %v2112 = vmul.f32 %v2100, %v939
      %v2113 = vmul.f32 %v2101, %v1068
      %v2114 = vmul.f32 %v2100, %v941
      %v2115 = vmul.f32 %v2101, %v1070
      %v2116 = vmul.f32 %v2102, %v934
      %v2117 = vmul.f32 %v2103, %v1063
      %v2118 = vmul.f32 %v2102, %v936
      %v2119 = vmul.f32 %v2103, %v1065
      %v2120 = vmul.f32 %v2102, %v939
      %v2121 = vmul.f32 %v2103, %v1068
      %v2122 = vmul.f32 %v2102, %v941
      %v2123 = vmul.f32 %v2103, %v1070
      %v2124 = vmul.f32 %v2104, %v934
      %v2125 = vmul.f32 %v2105, %v1063
      %v2126 = vmul.f32 %v2104, %v936
      %v2127 = vmul.f32 %v2105, %v1065
      %v2128 = vmul.f32 %v2104, %v939
      %v2129 = vmul.f32 %v2105, %v1068
      %v2130 = vmul.f32 %v2104, %v941
      %v2131 = vmul.f32 %v2105, %v1070
      %v2132 = vmul.f32 %v2106, %v934
      %v2133 = vmul.f32 %v2107, %v1063
      %v2134 = vmul.f32 %v2106, %v936
      %v2135 = vmul.f32 %v2107, %v1065
      %v2136 = vmul.f32 %v2106, %v939
      %v2137 = vmul.f32 %v2107, %v1068
      %v2138 = vmul.f32 %v2106, %v941
      %v2139 = vmul.f32 %v2107, %v1070
      %v2140 = vadd.f32 %v1858, %v2108
      %v2141 = vadd.f32 %v1859, %v2109
      %v2142 = vadd.f32 %v1860, %v2110
      %v2143 = vadd.f32 %v1861, %v2111
      %v2144 = vadd.f32 %v1862, %v2112
      %v2145 = vadd.f32 %v1863, %v2113
      %v2146 = vadd.f32 %v1864, %v2114
      %v2147 = vadd.f32 %v1865, %v2115
      %v2148 = vadd.f32 %v1866, %v2116
      %v2149 = vadd.f32 %v1867, %v2117
      %v2150 = vadd.f32 %v1868, %v2118
      %v2151 = vadd.f32 %v1869, %v2119
      %v2152 = vadd.f32 %v1870, %v2120
      %v2153 = vadd.f32 %v1871, %v2121
      %v2154 = vadd.f32 %v1872, %v2122
      %v2155 = vadd.f32 %v1873, %v2123
      %v2156 = vadd.f32 %v1874, %v2124
      %v2157 = vadd.f32 %v1875, %v2125
      %v2158 = vadd.f32 %v1876, %v2126
      %v2159 = vadd.f32 %v1877, %v2127
      %v2160 = vadd.f32 %v1878, %v2128
      %v2161 = vadd.f32 %v1879, %v2129
      %v2162 = vadd.f32 %v1880, %v2130
      %v2163 = vadd.f32 %v1881, %v2131
      %v2164 = vadd.f32 %v1882, %v2132
      %v2165 = vadd.f32 %v1883, %v2133
      %v2166 = vadd.f32 %v1884, %v2134
      %v2167 = vadd.f32 %v1885, %v2135
      %v2168 = vadd.f32 %v1886, %v2136
      %v2169 = vadd.f32 %v1887, %v2137
      %v2170 = vadd.f32 %v1888, %v2138
      %v2171 = vadd.f32 %v1889, %v2139
      %v2172 = vpack.c.bf16 %v2142, %v2140
      %v2173 = vpack.c.bf16 %v2143, %v2141
      %v2174 = vpack.c.bf16 %v2146, %v2144
      %v2175 = vpack.c.bf16 %v2147, %v2145
      %v2176 = vpack.c.bf16 %v2150, %v2148
      %v2177 = vpack.c.bf16 %v2151, %v2149
      %v2178 = vpack.c.bf16 %v2154, %v2152
      %v2179 = vpack.c.bf16 %v2155, %v2153
      %v2180 = vpack.c.bf16 %v2158, %v2156
      %v2181 = vpack.c.bf16 %v2159, %v2157
      %v2182 = vpack.c.bf16 %v2162, %v2160
      %v2183 = vpack.c.bf16 %v2163, %v2161
      %v2184 = vpack.c.bf16 %v2166, %v2164
      %v2185 = vpack.c.bf16 %v2167, %v2165
      %v2186 = vpack.c.bf16 %v2170, %v2168
      %v2187 = vpack.c.bf16 %v2171, %v2169
      %2189 = vset.pattern.permute.xlu0 0
      %2190 = vperm.xlu0 %2189, %v373
      %v2191 = vpop.permute.xlu0 %2190
      %2194 = vset.pattern.permute.xlu0 0
      %2195 = vperm.xlu0 %2194, %v374
      %v2196 = vpop.permute.xlu0 %2195
      %2199 = vset.pattern.permute.xlu0 0
      %2200 = vperm.xlu0 %2199, %v375
      %v2201 = vpop.permute.xlu0 %2200
      %2204 = vset.pattern.permute.xlu0 0
      %2205 = vperm.xlu0 %2204, %v376
      %v2206 = vpop.permute.xlu0 %2205
      %v2212 = vunpack.c.l.b16 %v369
      %v2213 = vunpack.c.l.b16 %v370
      %v2214 = vunpack.c.l.b16 %v371
      %v2215 = vunpack.c.l.b16 %v372
      %v2216 = vpack.c.b16 %v2213, %v2212
      %v2217 = vpack.c.b16 %v2215, %v2214
      %2220 = vmatpush.bf16.msra.mxu0 %v2186
      %2221 = vmatpush.bf16.msra.mxu0 %v2184
      %2222 = vmatpush.bf16.msra.mxu0 %v2182
      %2223 = vmatpush.bf16.msra.mxu0 %v2180
      %2224 = vmatpush.bf16.msra.mxu0 %v2178
      %2225 = vmatpush.bf16.msra.mxu0 %v2176
      %2226 = vmatpush.bf16.msra.mxu0 %v2174
      %2227 = vmatpush.bf16.msra.mxu0 %v2172
      %2228 = vmatmul.bf16.gmra.mxu0 %v2216
      %v2229 = vpop.f32.mrf.mxu0
      %v2230 = vadd.f32 %v2191, %v2229
      %v2231 = vpop.f32.mrf.mxu0
      %v2232 = vadd.f32 %v2196, %v2231
      %2233 = vmatmul.bf16.gmra.mxu0 %v2217
      %v2234 = vpop.f32.mrf.mxu0
      %v2235 = vadd.f32 %v2201, %v2234
      %v2236 = vpop.f32.mrf.mxu0
      %v2237 = vadd.f32 %v2206, %v2236
      %2238 = vdwg.mxu0
      %2239 = vmatpush.bf16.msra.mxu0 %v2187
      %2240 = vmatpush.bf16.msra.mxu0 %v2185
      %2241 = vmatpush.bf16.msra.mxu0 %v2183
      %2242 = vmatpush.bf16.msra.mxu0 %v2181
      %2243 = vmatpush.bf16.msra.mxu0 %v2179
      %2244 = vmatpush.bf16.msra.mxu0 %v2177
      %2245 = vmatpush.bf16.msra.mxu0 %v2175
      %2246 = vmatpush.bf16.msra.mxu0 %v2173
      %2247 = vmatmul.bf16.gmra.mxu0 %v2216
      %v2248 = vpop.f32.mrf.mxu0
      %v2249 = vadd.f32 %v2191, %v2248
      %v2250 = vpop.f32.mrf.mxu0
      %v2251 = vadd.f32 %v2196, %v2250
      %2252 = vmatmul.bf16.gmra.mxu0 %v2217
      %v2253 = vpop.f32.mrf.mxu0
      %v2254 = vadd.f32 %v2201, %v2253
      %v2255 = vpop.f32.mrf.mxu0
      %v2256 = vadd.f32 %v2206, %v2255
      %2257 = vdwg.mxu0
      %v2258 = vadd.f32 %v2230, %v265
      %v2259 = vadd.f32 %v2249, %v266
      %v2260 = vadd.f32 %v2232, %v267
      %v2261 = vadd.f32 %v2251, %v268
      %v2262 = vadd.f32 %v2235, %v269
      %v2263 = vadd.f32 %v2254, %v270
      %v2264 = vadd.f32 %v2237, %v271
      %v2265 = vadd.f32 %v2256, %v272
      %2266 = vst [vmem:[%s262] sm:$0xff] %v2258
      %2267 = vst [vmem:[%s262 + $0x8] sm:$0xff] %v2259
      %2268 = vst [vmem:[%s262 + $0x10] sm:$0xff] %v2260
      %2269 = vst [vmem:[%s262 + $0x18] sm:$0xff] %v2261
      %2270 = vst [vmem:[%s262 + $0x20] sm:$0xff] %v2262
      %2271 = vst [vmem:[%s262 + $0x28] sm:$0xff] %v2263
      %2272 = vst [vmem:[%s262 + $0x30] sm:$0xff] %v2264
      %2273 = vst [vmem:[%s262 + $0x38] sm:$0xff] %v2265
      %s2274 = smul.u32 2, %s21
      %p2275 = scmp.lt.s32.totalorder %s20, 1
      %s2276 = scalar_select %p2275, %s20, 1
      %p2277 = scmp.lt.s32.totalorder %s2274, 1
      %s2278 = scalar_select %p2277, %s2274, 1
      %s2279 = smul.addr %s2276, 8
      %s2280 = sadd.s32 %s2278, %s2279
      %s2281 = smul.addr %s2280, 8
      %s2282 = scalar_lea.vmem %s5, %s2281
      // Predicated region
      $region41: #{attention_block_forward.1} parent=39 // pred_check
        %p2283 = pneg %p160
      $region42: #{attention_block_forward.1} parent=39 // pred_check_branch
        %2285 = sbr.rel (%p2283) target = $region44
      $region43: #{attention_block_forward.1} parent=39 // pred_region
        %s2286 = smul.u32 2, %s21
      $region44: #{attention_block_forward.1} parent=39 // pred_fallthru
        _
    $region40: #{attention_block_forward.1} parent=5 // pred_fallthru
      _
    %p2287 = scmp.le.s32.totalorder 2, %s11
    // Predicated region
    $region45: #{attention_block_forward.1} parent=5 // pred_check
      %p2288 = pneg %p2287
    $region46: #{attention_block_forward.1} parent=5 // pred_check_branch
      %2290 = sbr.rel (%p2288) target = $region48
    $region47: #{attention_block_forward.1} parent=5 // pred_region
      %s2291 = ssub.s32 %s11, 2
      // Predicated region
      $region49: #{attention_block_forward.1} parent=47 // pred_check
        %p2292 = pneg %p166
      $region50: #{attention_block_forward.1} parent=47 // pred_check_branch
        %2294 = sbr.rel (%p2292) target = $region52
      $region51: #{attention_block_forward.1} parent=47 // pred_region
        %s2295 = smul.u32 2, %s23
        %p2296 = scmp.lt.s32.totalorder %s22, 1
        %s2297 = scalar_select %p2296, %s22, 1
        %p2298 = scmp.lt.s32.totalorder %s2295, 1
        %s2299 = scalar_select %p2298, %s2295, 1
        %s2300 = smul.addr %s2297, 8
        %s2301 = sadd.s32 %s2299, %s2300
        %s2302 = smul.addr %s2301, 8
        %s2303 = scalar_lea.vmem %s5, %s2302
      $region52: #{attention_block_forward.1} parent=47 // pred_fallthru
        _
    $region48: #{attention_block_forward.1} parent=5 // pred_fallthru
      _
  $region6: #{attention_block_forward.1} parent=0 // loop_footer
    %s15 = sadd.s32 1, %s11
  $region7: #{attention_block_forward.1} parent=0 // loop_footer_branch
    %10 = sbr.rel target = $region3
  $region8: #{attention_block_forward.1} parent=0 // loop_exit
    _

</llo_original>
